<compile_context>
chip_gen: v7x
topology: tpu7x:2x2x1
jax: 0.10.0
libtpu: 0.0.40
codegen_flags: <defaults>
</compile_context>

<pallas_src>
import numpy as np
import jax
import jax.numpy as jnp
from jax.experimental import pallas as pl
from jax.experimental.pallas import tpu as pltpu

# --- config mirroring `opt` in the PyTorch script ---------------------------
LATENT_DIM = 16
BATCH = 2
IMG_H = 4                      # opt.img_size_0
IMG_W = 3                      # opt.img_size_1
INPUT_DIM = LATENT_DIM + 12 + 1
C0, C1, C2, C3 = 128, 256, 512, 256
BN_EPS = 0.8                   # nn.BatchNorm2d(C, 0.8): 2nd positional arg is eps


def _bn_relu(x, gamma, beta, eps):
    """Single-pass training-mode BatchNorm2d (+ReLU) on a stacked (N*H*W, C) tile."""
    inv_n = 1.0 / x.shape[0]
    s = jnp.sum(x, axis=0, keepdims=True)
    s2 = jnp.sum(x * x, axis=0, keepdims=True)
    mean = s * inv_n
    var = s2 * inv_n - mean * mean                 # biased variance, eps=0.8 keeps it safe
    scale = jax.lax.rsqrt(var + eps) * gamma
    shift = beta - mean * scale
    return jnp.maximum(x * scale + shift, 0.0)


def _mm(a_f32, w_bf16):
    """bf16 MXU matmul with f32 accumulation (weights are pre-cast to bf16)."""
    return jnp.dot(a_f32.astype(jnp.bfloat16), w_bf16,
                   preferred_element_type=jnp.float32)


def generator_kernel(lhs1_ref, w1p_ref, wm1_ref, wm2_ref, wm3_ref, wm4_ref,
                     vecs_ref, out_ref):
    # l1: Linear(INPUT_DIM, 512) + ReLU.  lhs1 is block-diagonal (H*B, H*(K+1)) with a
    # ones column per block; w1p is the matching block-stacked (H*(K+1), 128) weight with
    # the bias folded in, so the result is already x = h.view(B,128,H,1) stacked as
    # (H*B, 128) with row index hh*B + b.  No sublane relayout needed.
    x = jnp.maximum(_mm(lhs1_ref[...], w1p_ref[...]), 0.0)                  # (H*B, 128)

    # map1: ConvTranspose2d(128,256,(1,3)) on width-1 input == one fused matmul with
    # wm1 packed as (128, 3*256), columns = w*256 + co.  Conv bias omitted (BN cancels it).
    y = _mm(x, wm1_ref[...])                                                # (H*B, W*256)
    # stack widths along sublanes -> (W*H*B, 256) = (24, 256); row = w*(H*B) + hh*B + b
    a = jnp.concatenate([y[:, w * C1:(w + 1) * C1] for w in range(IMG_W)], axis=0)
    a = _bn_relu(a, vecs_ref[0:1, :C1], vecs_ref[1:2, :C1], BN_EPS)

    # map2 / map3: 1x1 transposed convs == single stacked matmuls + BN + ReLU
    # (conv biases omitted — cancelled by the BN mean subtraction).
    a = _bn_relu(_mm(a, wm2_ref[...]), vecs_ref[2:3, :C2], vecs_ref[3:4, :C2], BN_EPS)
    a = _bn_relu(_mm(a, wm3_ref[...]), vecs_ref[4:5, :C3], vecs_ref[5:6, :C3], BN_EPS)

    # map4: 1x1 transposed conv 256 -> 1 as an MXU matmul against a (256,1) bf16 column
    # (MXU is idle here; avoids a VPU multiply + XLU lane-reduce tail).  bm4 is real
    # (no BN follows), stored at vecs[6, 0].
    out_ref[...] = _mm(a, wm4_ref[...]) + vecs_ref[6:7, 0:1]


def init_params(key):
    ks = jax.random.split(key, 10)

    def u(k, shape, fan_in):
        b = 1.0 / np.sqrt(fan_in)
        return jax.random.uniform(k, shape, jnp.float32, -b, b)

    p = {}
    p["w1"] = u(ks[0], (INPUT_DIM, C0 * IMG_H), INPUT_DIM)     # cols = c*4 + hh (torch order)
    p["b1"] = u(ks[1], (C0 * IMG_H,), INPUT_DIM)
    p["wm1"] = u(ks[2], (IMG_W, C0, C1), C0 * IMG_W)           # [w, cin, cout] of ConvT weight (cin,cout,1,3)
    p["bm1"] = u(ks[3], (1, C1), C0 * IMG_W)
    p["wm2"] = u(ks[4], (C1, C2), C1)                          # 1x1 ConvT: [cin, cout]
    p["bm2"] = u(ks[5], (1, C2), C1)
    p["wm3"] = u(ks[6], (C2, C3), C2)
    p["bm3"] = u(ks[7], (1, C3), C2)
    p["wm4"] = u(ks[8], (1, C3), C3)                           # row-vector (cin=256 -> cout=1)
    p["bm4"] = u(ks[9], (1, 1), C3)
    p["g1"], p["be1"] = jnp.ones((1, C1), jnp.float32), jnp.zeros((1, C1), jnp.float32)
    p["g2"], p["be2"] = jnp.ones((1, C2), jnp.float32), jnp.zeros((1, C2), jnp.float32)
    p["g3"], p["be3"] = jnp.ones((1, C3), jnp.float32), jnp.zeros((1, C3), jnp.float32)
    return p


def prepare_kernel_params(params):
    """One-time weight permutation / packing / bf16 cast, hoisted out of the forward."""
    # --- l1 weight: block-diagonal packing with the bias folded in -----------------
    # w1p[h*(K+1)+k, c] = W1[k, c*4+h] for k < K ; = b1[c*4+h] for k == K.
    w1_r = params["w1"].reshape(INPUT_DIM, C0, IMG_H)          # [k, c, h]
    b1_r = params["b1"].reshape(C0, IMG_H)                     # [c, h]
    blocks = [jnp.concatenate([w1_r[:, :, h], b1_r[:, h][None, :]], axis=0)
              for h in range(IMG_H)]
    w1p = jnp.concatenate(blocks, axis=0).astype(jnp.bfloat16)  # (H*(K+1), 128)

    # --- map1 weight: pack ConvT (1,3) weight to (128, 3*256): column = w*256 + co --
    wm1 = jnp.transpose(params["wm1"], (1, 0, 2)).reshape(C0, IMG_W * C1).astype(jnp.bfloat16)

    # --- pack all small per-channel f32 vectors into ONE (8, 512) array -------------
    # rows: g1, be1, g2, be2, g3, be3, bm4(scalar at lane 0), zeros.   (conv biases
    # bm1/bm2/bm3 are dropped entirely: BN mean subtraction cancels them.)
    def pad_row(v):
        v = jnp.asarray(v, jnp.float32).reshape(-1)
        return jnp.pad(v, (0, C2 - v.shape[0]))

    vecs = jnp.stack([
        pad_row(params["g1"]), pad_row(params["be1"]),
        pad_row(params["g2"]), pad_row(params["be2"]),
        pad_row(params["g3"]), pad_row(params["be3"]),
        pad_row(params["bm4"]),
        jnp.zeros((C2,), jnp.float32),
    ])                                                          # (8, 512) f32

    return {
        "w1p": w1p,
        "wm1": wm1,
        "wm2": params["wm2"].astype(jnp.bfloat16),
        "wm3": params["wm3"].astype(jnp.bfloat16),
        "wm4": params["wm4"].reshape(C3, 1).astype(jnp.bfloat16),   # (256, 1) MXU column
        "vecs": vecs,
    }


def generator_forward(kparams, z, fake_labels_Nb, fake_labels_o, natoms_fake):
    # TODO(synk): the PyTorch forward builds `x` from an undefined global `imgs`;
    # it is unused (based_on_ground=False), so it is skipped here.
    gen_input = jnp.concatenate(
        [z, fake_labels_Nb, fake_labels_o, natoms_fake], axis=-1).astype(jnp.float32)
    B = gen_input.shape[0]

    # Block-diagonal lhs for the fused l1: row hh*B+b carries gen_input[b] (+ a ones
    # column for the folded bias) in block hh.  Layout plumbing only; built once per call.
    gen_aug = jnp.concatenate([gen_input, jnp.ones((B, 1), jnp.float32)], axis=-1)
    lhs1 = jnp.kron(jnp.eye(IMG_H, dtype=jnp.float32), gen_aug)   # (H*B, H*(K+1))

    vmem = pl.BlockSpec(memory_space=pltpu.MemorySpace.VMEM)
    args = (lhs1, kparams["w1p"], kparams["wm1"], kparams["wm2"],
            kparams["wm3"], kparams["wm4"], kparams["vecs"])

    # NOTE: no batch-parallel grid here on purpose — training-mode BatchNorm statistics
    # are over the full N*H*W, so a parallel batch axis would silently change the math.
    # For large B this needs a stats-pass / apply-pass restructuring first.
    out_flat = pl.pallas_call(
        generator_kernel,
        out_shape=jax.ShapeDtypeStruct((IMG_W * IMG_H * B, 1), jnp.float32),
        in_specs=[vmem] * len(args),
        out_specs=vmem,
    )(*args)

    # rows are ordered w*(H*B) + hh*B + b -> unscramble to (B, H, W) in the wrapper
    return out_flat.reshape(IMG_W, IMG_H, B).transpose(2, 1, 0)


def reference_forward(params, z, nb, o, na):
    """Pure-JAX (NCHW, f32) reference of the PyTorch forward, for sanity checking."""
    gen_input = jnp.concatenate([z, nb, o, na], axis=-1).astype(jnp.float32)
    B = gen_input.shape[0]
    h = jnp.maximum(gen_input @ params["w1"] + params["b1"], 0.0)       # (B, 512)
    x = h.reshape(B, C0, IMG_H)                                          # NCHW with W=1

    def bn_relu(y, g, b):
        mean = y.mean(axis=(0, 2, 3), keepdims=True)
        var = ((y - mean) ** 2).mean(axis=(0, 2, 3), keepdims=True)
        yh = (y - mean) / jnp.sqrt(var + BN_EPS)
        return jnp.maximum(yh * g.reshape(1, -1, 1, 1) + b.reshape(1, -1, 1, 1), 0.0)

    y = jnp.einsum("bih,wio->bohw", x, params["wm1"]) + params["bm1"].reshape(1, -1, 1, 1)
    y = bn_relu(y, params["g1"], params["be1"])
    y = jnp.einsum("bihw,io->bohw", y, params["wm2"]) + params["bm2"].reshape(1, -1, 1, 1)
    y = bn_relu(y, params["g2"], params["be2"])
    y = jnp.einsum("bihw,io->bohw", y, params["wm3"]) + params["bm3"].reshape(1, -1, 1, 1)
    y = bn_relu(y, params["g3"], params["be3"])
    y = jnp.einsum("bihw,oi->bohw", y, params["wm4"]) + params["bm4"].reshape(1, 1, 1, 1)
    return y.reshape(B, -1).reshape(B, IMG_H, IMG_W)


if __name__ == "__main__":
    key = jax.random.PRNGKey(0)
    kp, kz, knb, ko, kna = jax.random.split(key, 5)
    params = init_params(kp)
    kparams = prepare_kernel_params(params)   # hoisted: permutation / packing / bf16 cast

    # conditioning split: 12 label dims = 11 (Nb) + 1 (o), plus 1 natoms dim
    z = jax.random.normal(kz, (BATCH, LATENT_DIM), jnp.float32)
    fake_labels_Nb = jax.random.normal(knb, (BATCH, 11), jnp.float32)
    fake_labels_o = jax.random.normal(ko, (BATCH, 1), jnp.float32)
    natoms_fake = jax.random.normal(kna, (BATCH, 1), jnp.float32)

    img = generator_forward(kparams, z, fake_labels_Nb, fake_labels_o, natoms_fake)
    img = jax.block_until_ready(img)
    assert img.shape == (BATCH, IMG_H, IMG_W)

    ref = reference_forward(params, z, fake_labels_Nb, fake_labels_o, natoms_fake)
    np.testing.assert_allclose(np.asarray(img), np.asarray(ref), rtol=5e-2, atol=5e-2)

    print("KERNEL_OK")
</pallas_src>

<mosaic_0001>
module attributes {stable_mosaic.version = 11 : i64} {
  func.func @generator_kernel(%arg0: memref<8x120xf32, #tpu.memory_space<vmem>>, %arg1: memref<120x128xbf16, #tpu.memory_space<vmem>>, %arg2: memref<128x768xbf16, #tpu.memory_space<vmem>>, %arg3: memref<256x512xbf16, #tpu.memory_space<vmem>>, %arg4: memref<512x256xbf16, #tpu.memory_space<vmem>>, %arg5: memref<256x1xbf16, #tpu.memory_space<vmem>>, %arg6: memref<8x512xf32, #tpu.memory_space<vmem>>, %arg7: memref<24x1xf32, #tpu.memory_space<vmem>>) attributes {dimension_semantics = [], scalar_prefetch = 0 : i64, scratch_operands = 0 : i64, tpu.core_type = #tpu.core_type<tc>} {
    %c0 = arith.constant 0 : index
    %c0_0 = arith.constant 0 : index
    %0 = vector.load %arg0[%c0, %c0_0] : memref<8x120xf32, #tpu.memory_space<vmem>>, vector<8x120xf32>
    %c0_1 = arith.constant 0 : index
    %c0_2 = arith.constant 0 : index
    %1 = vector.load %arg1[%c0_1, %c0_2] : memref<120x128xbf16, #tpu.memory_space<vmem>>, vector<120x128xbf16>
    %2 = arith.truncf %0 : vector<8x120xf32> to vector<8x120xbf16>
    %cst = arith.constant dense<0.000000e+00> : vector<8x128xf32>
    %3 = tpu.matmul %2, %1, %cst {dimension_numbers = #tpu.dot_dimension_numbers<[1], [0], [0], [1], [0, 0, 1, 1], [], []>} : vector<8x120xbf16>, vector<120x128xbf16>, vector<8x128xf32> -> vector<8x128xf32>
    %cst_3 = arith.constant 0.000000e+00 : f32
    %4 = vector.broadcast %cst_3 : f32 to vector<8x128xf32>
    %5 = arith.maximumf %3, %4 : vector<8x128xf32>
    %c0_4 = arith.constant 0 : index
    %c0_5 = arith.constant 0 : index
    %6 = vector.load %arg2[%c0_4, %c0_5] : memref<128x768xbf16, #tpu.memory_space<vmem>>, vector<128x768xbf16>
    %7 = arith.truncf %5 : vector<8x128xf32> to vector<8x128xbf16>
    %cst_6 = arith.constant dense<0.000000e+00> : vector<8x768xf32>
    %8 = tpu.matmul %7, %6, %cst_6 {dimension_numbers = #tpu.dot_dimension_numbers<[1], [0], [0], [1], [0, 0, 1, 1], [], []>} : vector<8x128xbf16>, vector<128x768xbf16>, vector<8x768xf32> -> vector<8x768xf32>
    %9 = vector.extract_strided_slice %8 {offsets = [0, 0], sizes = [8, 256], strides = [1, 1]} : vector<8x768xf32> to vector<8x256xf32>
    %10 = vector.extract_strided_slice %8 {offsets = [0, 256], sizes = [8, 256], strides = [1, 1]} : vector<8x768xf32> to vector<8x256xf32>
    %11 = vector.extract_strided_slice %8 {offsets = [0, 512], sizes = [8, 256], strides = [1, 1]} : vector<8x768xf32> to vector<8x256xf32>
    %12 = tpu.concatenate %9, %10, %11 in 0 : vector<8x256xf32>, vector<8x256xf32>, vector<8x256xf32> -> vector<24x256xf32>
    %c0_7 = arith.constant 0 : index
    %c0_8 = arith.constant 0 : index
    %13 = vector.load %arg6[%c0_7, %c0_8] : memref<8x512xf32, #tpu.memory_space<vmem>>, vector<1x256xf32>
    %c1 = arith.constant 1 : index
    %c0_9 = arith.constant 0 : index
    %14 = vector.load %arg6[%c1, %c0_9] : memref<8x512xf32, #tpu.memory_space<vmem>>, vector<1x256xf32>
    %cst_10 = arith.constant dense<0.000000e+00> : vector<256xf32>
    %15 = vector.multi_reduction <add>, %12, %cst_10 [0] : vector<24x256xf32> to vector<256xf32>
    %16 = vector.shape_cast %15 : vector<256xf32> to vector<1x256xf32>
    %17 = arith.mulf %12, %12 : vector<24x256xf32>
    %cst_11 = arith.constant dense<0.000000e+00> : vector<256xf32>
    %18 = vector.multi_reduction <add>, %17, %cst_11 [0] : vector<24x256xf32> to vector<256xf32>
    %19 = vector.shape_cast %18 : vector<256xf32> to vector<1x256xf32>
    %cst_12 = arith.constant 0.0416666679 : f32
    %20 = vector.broadcast %cst_12 : f32 to vector<1x256xf32>
    %21 = arith.mulf %16, %20 : vector<1x256xf32>
    %cst_13 = arith.constant 0.0416666679 : f32
    %22 = vector.broadcast %cst_13 : f32 to vector<1x256xf32>
    %23 = arith.mulf %19, %22 : vector<1x256xf32>
    %24 = arith.mulf %21, %21 : vector<1x256xf32>
    %25 = arith.subf %23, %24 : vector<1x256xf32>
    %cst_14 = arith.constant 8.000000e-01 : f32
    %26 = vector.broadcast %cst_14 : f32 to vector<1x256xf32>
    %27 = arith.addf %25, %26 : vector<1x256xf32>
    %28 = math.rsqrt %27 : vector<1x256xf32>
    %29 = arith.mulf %28, %13 : vector<1x256xf32>
    %30 = arith.mulf %21, %29 : vector<1x256xf32>
    %31 = arith.subf %14, %30 : vector<1x256xf32>
    %32 = vector.broadcast %29 : vector<1x256xf32> to vector<24x256xf32>
    %33 = arith.mulf %12, %32 : vector<24x256xf32>
    %34 = vector.broadcast %31 : vector<1x256xf32> to vector<24x256xf32>
    %35 = arith.addf %33, %34 : vector<24x256xf32>
    %cst_15 = arith.constant 0.000000e+00 : f32
    %36 = vector.broadcast %cst_15 : f32 to vector<24x256xf32>
    %37 = arith.maximumf %35, %36 : vector<24x256xf32>
    %c0_16 = arith.constant 0 : index
    %c0_17 = arith.constant 0 : index
    %38 = vector.load %arg3[%c0_16, %c0_17] : memref<256x512xbf16, #tpu.memory_space<vmem>>, vector<256x512xbf16>
    %39 = arith.truncf %37 : vector<24x256xf32> to vector<24x256xbf16>
    %cst_18 = arith.constant dense<0.000000e+00> : vector<24x512xf32>
    %40 = tpu.matmul %39, %38, %cst_18 {dimension_numbers = #tpu.dot_dimension_numbers<[1], [0], [0], [1], [0, 0, 1, 1], [], []>} : vector<24x256xbf16>, vector<256x512xbf16>, vector<24x512xf32> -> vector<24x512xf32>
    %c2 = arith.constant 2 : index
    %c0_19 = arith.constant 0 : index
    %41 = vector.load %arg6[%c2, %c0_19] : memref<8x512xf32, #tpu.memory_space<vmem>>, vector<1x512xf32>
    %c3 = arith.constant 3 : index
    %c0_20 = arith.constant 0 : index
    %42 = vector.load %arg6[%c3, %c0_20] : memref<8x512xf32, #tpu.memory_space<vmem>>, vector<1x512xf32>
    %cst_21 = arith.constant dense<0.000000e+00> : vector<512xf32>
    %43 = vector.multi_reduction <add>, %40, %cst_21 [0] : vector<24x512xf32> to vector<512xf32>
    %44 = vector.shape_cast %43 : vector<512xf32> to vector<1x512xf32>
    %45 = arith.mulf %40, %40 : vector<24x512xf32>
    %cst_22 = arith.constant dense<0.000000e+00> : vector<512xf32>
    %46 = vector.multi_reduction <add>, %45, %cst_22 [0] : vector<24x512xf32> to vector<512xf32>
    %47 = vector.shape_cast %46 : vector<512xf32> to vector<1x512xf32>
    %cst_23 = arith.constant 0.0416666679 : f32
    %48 = vector.broadcast %cst_23 : f32 to vector<1x512xf32>
    %49 = arith.mulf %44, %48 : vector<1x512xf32>
    %cst_24 = arith.constant 0.0416666679 : f32
    %50 = vector.broadcast %cst_24 : f32 to vector<1x512xf32>
    %51 = arith.mulf %47, %50 : vector<1x512xf32>
    %52 = arith.mulf %49, %49 : vector<1x512xf32>
    %53 = arith.subf %51, %52 : vector<1x512xf32>
    %cst_25 = arith.constant 8.000000e-01 : f32
    %54 = vector.broadcast %cst_25 : f32 to vector<1x512xf32>
    %55 = arith.addf %53, %54 : vector<1x512xf32>
    %56 = math.rsqrt %55 : vector<1x512xf32>
    %57 = arith.mulf %56, %41 : vector<1x512xf32>
    %58 = arith.mulf %49, %57 : vector<1x512xf32>
    %59 = arith.subf %42, %58 : vector<1x512xf32>
    %60 = vector.broadcast %57 : vector<1x512xf32> to vector<24x512xf32>
    %61 = arith.mulf %40, %60 : vector<24x512xf32>
    %62 = vector.broadcast %59 : vector<1x512xf32> to vector<24x512xf32>
    %63 = arith.addf %61, %62 : vector<24x512xf32>
    %cst_26 = arith.constant 0.000000e+00 : f32
    %64 = vector.broadcast %cst_26 : f32 to vector<24x512xf32>
    %65 = arith.maximumf %63, %64 : vector<24x512xf32>
    %c0_27 = arith.constant 0 : index
    %c0_28 = arith.constant 0 : index
    %66 = vector.load %arg4[%c0_27, %c0_28] : memref<512x256xbf16, #tpu.memory_space<vmem>>, vector<512x256xbf16>
    %67 = arith.truncf %65 : vector<24x512xf32> to vector<24x512xbf16>
    %cst_29 = arith.constant dense<0.000000e+00> : vector<24x256xf32>
    %68 = tpu.matmul %67, %66, %cst_29 {dimension_numbers = #tpu.dot_dimension_numbers<[1], [0], [0], [1], [0, 0, 1, 1], [], []>} : vector<24x512xbf16>, vector<512x256xbf16>, vector<24x256xf32> -> vector<24x256xf32>
    %c4 = arith.constant 4 : index
    %c0_30 = arith.constant 0 : index
    %69 = vector.load %arg6[%c4, %c0_30] : memref<8x512xf32, #tpu.memory_space<vmem>>, vector<1x256xf32>
    %c5 = arith.constant 5 : index
    %c0_31 = arith.constant 0 : index
    %70 = vector.load %arg6[%c5, %c0_31] : memref<8x512xf32, #tpu.memory_space<vmem>>, vector<1x256xf32>
    %cst_32 = arith.constant dense<0.000000e+00> : vector<256xf32>
    %71 = vector.multi_reduction <add>, %68, %cst_32 [0] : vector<24x256xf32> to vector<256xf32>
    %72 = vector.shape_cast %71 : vector<256xf32> to vector<1x256xf32>
    %73 = arith.mulf %68, %68 : vector<24x256xf32>
    %cst_33 = arith.constant dense<0.000000e+00> : vector<256xf32>
    %74 = vector.multi_reduction <add>, %73, %cst_33 [0] : vector<24x256xf32> to vector<256xf32>
    %75 = vector.shape_cast %74 : vector<256xf32> to vector<1x256xf32>
    %cst_34 = arith.constant 0.0416666679 : f32
    %76 = vector.broadcast %cst_34 : f32 to vector<1x256xf32>
    %77 = arith.mulf %72, %76 : vector<1x256xf32>
    %cst_35 = arith.constant 0.0416666679 : f32
    %78 = vector.broadcast %cst_35 : f32 to vector<1x256xf32>
    %79 = arith.mulf %75, %78 : vector<1x256xf32>
    %80 = arith.mulf %77, %77 : vector<1x256xf32>
    %81 = arith.subf %79, %80 : vector<1x256xf32>
    %cst_36 = arith.constant 8.000000e-01 : f32
    %82 = vector.broadcast %cst_36 : f32 to vector<1x256xf32>
    %83 = arith.addf %81, %82 : vector<1x256xf32>
    %84 = math.rsqrt %83 : vector<1x256xf32>
    %85 = arith.mulf %84, %69 : vector<1x256xf32>
    %86 = arith.mulf %77, %85 : vector<1x256xf32>
    %87 = arith.subf %70, %86 : vector<1x256xf32>
    %88 = vector.broadcast %85 : vector<1x256xf32> to vector<24x256xf32>
    %89 = arith.mulf %68, %88 : vector<24x256xf32>
    %90 = vector.broadcast %87 : vector<1x256xf32> to vector<24x256xf32>
    %91 = arith.addf %89, %90 : vector<24x256xf32>
    %cst_37 = arith.constant 0.000000e+00 : f32
    %92 = vector.broadcast %cst_37 : f32 to vector<24x256xf32>
    %93 = arith.maximumf %91, %92 : vector<24x256xf32>
    %c0_38 = arith.constant 0 : index
    %c0_39 = arith.constant 0 : index
    %94 = vector.load %arg5[%c0_38, %c0_39] : memref<256x1xbf16, #tpu.memory_space<vmem>>, vector<256x1xbf16>
    %95 = arith.truncf %93 : vector<24x256xf32> to vector<24x256xbf16>
    %cst_40 = arith.constant dense<0.000000e+00> : vector<24x1xf32>
    %96 = tpu.matmul %95, %94, %cst_40 {dimension_numbers = #tpu.dot_dimension_numbers<[1], [0], [0], [1], [0, 0, 1, 1], [], []>} : vector<24x256xbf16>, vector<256x1xbf16>, vector<24x1xf32> -> vector<24x1xf32>
    %c6 = arith.constant 6 : index
    %c0_41 = arith.constant 0 : index
    %97 = vector.load %arg6[%c6, %c0_41] : memref<8x512xf32, #tpu.memory_space<vmem>>, vector<1x1xf32>
    %98 = vector.broadcast %97 : vector<1x1xf32> to vector<24x1xf32>
    %99 = arith.addf %96, %98 : vector<24x1xf32>
    %c0_42 = arith.constant 0 : index
    %c0_43 = arith.constant 0 : index
    %100 = vector.load %arg7[%c0_42, %c0_43] : memref<24x1xf32, #tpu.memory_space<vmem>>, vector<24x1xf32>
    tpu.vector_store %arg7[%c0_42, %c0_43], %99 {strides = array<i32>} : memref<24x1xf32, #tpu.memory_space<vmem>>, vector<24x1xf32>,
    return
  }
}

</mosaic_0001>

<llo_original>
// kernel: tpu_custom_call.1
$region0: #{tpu_custom_call.1}
  #allocation0 [shape = 'u32[]', space=smem, size = 0x4, offset = 0x4, fixed_abs, tag = 'smem constant byte address 0x4 - core index']
  #allocation1 [shape = 'u32[144,128]{1,0:T(1,128)}', space=vmem, size = 0x12000, scoped, tag = 'internal scratch']
  %s0 = inlined_call_operand.vmem [shape: f32[8,120], index: 0, kind: input, shape index: {}]
  %s1 = inlined_call_operand.vmem [shape: bf16[120,128], index: 1, kind: input, shape index: {}]
  %s2 = inlined_call_operand.hbm [shape: bf16[128,768], index: 2, kind: input, shape index: {}]
  %s3 = inlined_call_operand.hbm [shape: bf16[256,512], index: 3, kind: input, shape index: {}]
  %s4 = inlined_call_operand.hbm [shape: bf16[512,256], index: 4, kind: input, shape index: {}]
  %s5 = inlined_call_operand.vmem [shape: bf16[256,1], index: 5, kind: input, shape index: {}]
  %s6 = inlined_call_operand.vmem [shape: f32[8,512], index: 6, kind: input, shape index: {}]
  %s7 = inlined_call_operand.vmem [shape: f32[24,1], index: 7, kind: output, shape index: {}]
  %s8 = sld [smem:[#allocation0]]
  $region50: #{tpu_custom_call.1} parent=0
    _
  %s10 = ssub.s32 1, %s8
  %s11 = scalar_select 0, %s10, %s8
  $region1: #{tpu_custom_call.1} parent=0
    #allocation2 [shape = 'u8[196608]{0}', space=vmem, size = 0x30000, scoped, tag = 'input window, operand 2, single buffered']
    #allocation3 [shape = 's32[1]{0}', space=sflag, size = 0x4, scoped, tag = 'scoped memory for tpu_custom_call.1']
    #allocation4 [shape = 'u8[262144]{0}', space=vmem, size = 0x40000, scoped, tag = 'input window, operand 3, single buffered']
    #allocation5 [shape = 's32[1]{0}', space=sflag, size = 0x4, scoped, tag = 'scoped memory for tpu_custom_call.1']
    #allocation6 [shape = 'u8[262144]{0}', space=vmem, size = 0x40000, scoped, tag = 'input window, operand 4, single buffered']
    %12 = vsyncpa [#allocation3], 0
    %13 = vsyncpa [#allocation5], 0
    // Predicated region
    $region2: #{tpu_custom_call.1} parent=1 // pred_check
      _
    $region3: #{tpu_custom_call.1} parent=1 // pred_check_branch
      %15 = sbr.rel (0) target = $region5
    $region4: #{tpu_custom_call.1} parent=1 // pred_region
      _
    $region5: #{tpu_custom_call.1} parent=1 // pred_fallthru
      _
    // Predicated region
    $region6: #{tpu_custom_call.1} parent=1 // pred_check
      _
    $region7: #{tpu_custom_call.1} parent=1 // pred_check_branch
      %17 = sbr.rel (0) target = $region9
    $region8: #{tpu_custom_call.1} parent=1 // pred_region
      _
    $region9: #{tpu_custom_call.1} parent=1 // pred_fallthru
      _
    // Predicated region
    $region10: #{tpu_custom_call.1} parent=1 // pred_check
      _
    $region11: #{tpu_custom_call.1} parent=1 // pred_check_branch
      %19 = sbr.rel (0) target = $region13
    $region12: #{tpu_custom_call.1} parent=1 // pred_region
      %s21 = ssub.s32 6144, 6144
      %22 = vsyncadd [#allocation3], %s21
      %s23 = sshll.u32 [#allocation2], 4
      %s24 = int_to_ptr.vmem [resolvable:$true] %s23
      %29 = dma.hbm_to_vmem [thread:$0]  %s2, 6144, %s24, [#allocation3], 384, 384, 24
    $region13: #{tpu_custom_call.1} parent=1 // pred_fallthru
      _
    // Predicated region
    $region14: #{tpu_custom_call.1} parent=1 // pred_check
      _
    $region15: #{tpu_custom_call.1} parent=1 // pred_check_branch
      %31 = sbr.rel (0) target = $region17
    $region16: #{tpu_custom_call.1} parent=1 // pred_region
      %s33 = ssub.s32 8192, 8192
      %34 = vsyncadd [#allocation5], %s33
      %s35 = sshll.u32 [#allocation4], 4
      %s36 = int_to_ptr.vmem [resolvable:$true] %s35
      %41 = dma.hbm_to_vmem [thread:$0]  %s3, 8192, %s36, [#allocation5], 256, 256, 16
    $region17: #{tpu_custom_call.1} parent=1 // pred_fallthru
      _
    // Predicated region
    $region18: #{tpu_custom_call.1} parent=1 // pred_check
      _
    $region19: #{tpu_custom_call.1} parent=1 // pred_check_branch
      %43 = sbr.rel (0) target = $region21
    $region20: #{tpu_custom_call.1} parent=1 // pred_region
      %s45 = ssub.s32 8192, 8192
      %46 = vsyncadd [#allocation5], %s45
      %s47 = sshll.u32 [#allocation6], 4
      %s48 = int_to_ptr.vmem [resolvable:$true] %s47
      %53 = dma.hbm_to_vmem [thread:$0]  %s4, 8192, %s48, [#allocation5], 128, 128, 8
    $region21: #{tpu_custom_call.1} parent=1 // pred_fallthru
      _
    // Predicated region
    $region22: #{tpu_custom_call.1} parent=1 // pred_check
      _
    $region23: #{tpu_custom_call.1} parent=1 // pred_check_branch
      %55 = sbr.rel (0) target = $region25
    $region24: #{tpu_custom_call.1} parent=1 // pred_region
      _
    $region25: #{tpu_custom_call.1} parent=1 // pred_fallthru
      _
    // Predicated region
    $region26: #{tpu_custom_call.1} parent=1 // pred_check
      _
    $region27: #{tpu_custom_call.1} parent=1 // pred_check_branch
      %57 = sbr.rel (0) target = $region29
    $region28: #{tpu_custom_call.1} parent=1 // pred_region
      _
    $region29: #{tpu_custom_call.1} parent=1 // pred_fallthru
      _
    // Predicated region
    $region30: #{tpu_custom_call.1} parent=1 // pred_check
      _
    $region31: #{tpu_custom_call.1} parent=1 // pred_check_branch
      %59 = sbr.rel (0) target = $region33
    $region32: #{tpu_custom_call.1} parent=1 // pred_region
      %60 = dma.done [#allocation3], 6144
    $region33: #{tpu_custom_call.1} parent=1 // pred_fallthru
      _
    // Predicated region
    $region34: #{tpu_custom_call.1} parent=1 // pred_check
      _
    $region35: #{tpu_custom_call.1} parent=1 // pred_check_branch
      %62 = sbr.rel (0) target = $region37
    $region36: #{tpu_custom_call.1} parent=1 // pred_region
      %63 = dma.done [#allocation5], 8192
    $region37: #{tpu_custom_call.1} parent=1 // pred_fallthru
      _
    // Predicated region
    $region38: #{tpu_custom_call.1} parent=1 // pred_check
      _
    $region39: #{tpu_custom_call.1} parent=1 // pred_check_branch
      %65 = sbr.rel (0) target = $region41
    $region40: #{tpu_custom_call.1} parent=1 // pred_region
      %66 = dma.done [#allocation5], 8192
    $region41: #{tpu_custom_call.1} parent=1 // pred_fallthru
      _
    %v68 = vld [vmem:[%s0] sm:$0xff]
    %v69 = vld [vmem:[%s1] sm:$0xf]
    %v70 = vld [vmem:[%s1 + $0x4] sm:$0xf]
    %v71 = vld [vmem:[%s1 + $0x8] sm:$0xf]
    %v72 = vld [vmem:[%s1 + $0xc] sm:$0xf]
    %v73 = vld [vmem:[%s1 + $0x10] sm:$0xf]
    %v74 = vld [vmem:[%s1 + $0x14] sm:$0xf]
    %v75 = vld [vmem:[%s1 + $0x18] sm:$0xf]
    %v76 = vld [vmem:[%s1 + $0x1c] sm:$0xf]
    %v77 = vld [vmem:[%s1 + $0x20] sm:$0xf]
    %v78 = vld [vmem:[%s1 + $0x24] sm:$0xf]
    %v79 = vld [vmem:[%s1 + $0x28] sm:$0xf]
    %v80 = vld [vmem:[%s1 + $0x2c] sm:$0xf]
    %v81 = vld [vmem:[%s1 + $0x30] sm:$0xf]
    %v82 = vld [vmem:[%s1 + $0x34] sm:$0xf]
    %v83 = vld [vmem:[%s1 + $0x38] sm:$0xf]
    %v84 = vpack.c.bf16 %v68, %v68
    %v100 = vunpack.c.l.b16 %v69
    %v101 = vunpack.c.l.b16 %v70
    %v102 = vunpack.c.l.b16 %v71
    %v103 = vunpack.c.l.b16 %v72
    %v104 = vunpack.c.l.b16 %v73
    %v105 = vunpack.c.l.b16 %v74
    %v106 = vunpack.c.l.b16 %v75
    %v107 = vunpack.c.l.b16 %v76
    %v108 = vunpack.c.l.b16 %v77
    %v109 = vunpack.c.l.b16 %v78
    %v110 = vunpack.c.l.b16 %v79
    %v111 = vunpack.c.l.b16 %v80
    %v112 = vunpack.c.l.b16 %v81
    %v113 = vunpack.c.l.b16 %v82
    %v114 = vunpack.c.l.b16 %v83
    %v115 = vpack.c.b16 %v101, %v100
    %v116 = vpack.c.b16 %v103, %v102
    %v117 = vpack.c.b16 %v105, %v104
    %v118 = vpack.c.b16 %v107, %v106
    %v119 = vpack.c.b16 %v109, %v108
    %v120 = vpack.c.b16 %v111, %v110
    %v121 = vpack.c.b16 %v113, %v112
    %v122 = vpack.c.b16 %v114, %v114
    %vm130 = vcmask 982016
    %v132 = vsel %vm130, %v84, 0
    %vm134 = vcmask 1043456
    %v136 = vsel %vm134, %v122, 0
    %138 = vmatprep.subr.bf16.mxu0 0
    %139 = vmatpush1.bf16.msra.mxu0 %v115
    %140 = vmatprep.subr.bf16.mxu0 0
    %141 = vmatpush1.bf16.msra.mxu0 %v116
    %142 = vmatprep.subr.bf16.mxu0 0
    %143 = vmatpush1.bf16.msra.mxu0 %v117
    %144 = vmatprep.subr.bf16.mxu0 0
    %145 = vmatpush1.bf16.msra.mxu0 %v118
    %146 = vmatprep.subr.bf16.mxu0 0
    %147 = vmatpush1.bf16.msra.mxu0 %v119
    %148 = vmatprep.subr.bf16.mxu0 0
    %149 = vmatpush1.bf16.msra.mxu0 %v120
    %150 = vmatprep.subr.bf16.mxu0 0
    %151 = vmatpush1.bf16.msra.mxu0 %v121
    %152 = vmatprep.subr.bf16.mxu0 0
    %153 = vmatpush1.bf16.msra.mxu0 %v136
    %154 = vmatprep.subr.bf16.mxu0 0
    %155 = vmatpush1.bf16.msra.mxu0 0
    %156 = vmatprep.subr.bf16.mxu0 0
    %157 = vmatpush1.bf16.msra.mxu0 0
    %158 = vmatprep.subr.bf16.mxu0 0
    %159 = vmatpush1.bf16.msra.mxu0 0
    %160 = vmatprep.subr.bf16.mxu0 0
    %161 = vmatpush1.bf16.msra.mxu0 0
    %162 = vmatprep.subr.bf16.mxu0 0
    %163 = vmatpush1.bf16.msra.mxu0 0
    %164 = vmatprep.subr.bf16.mxu0 0
    %165 = vmatpush1.bf16.msra.mxu0 0
    %166 = vmatprep.subr.bf16.mxu0 0
    %167 = vmatpush1.bf16.msra.mxu0 0
    %168 = vmatprep.subr.bf16.mxu0 0
    %169 = vmatpush1.bf16.msra.mxu0 0
    %170 = vmatprep.mubr.bf16.mxu0 0
    %171 = vmatmul.mubr.bf16.gmra.mrb[0].mxu0 %v132
    %v172 = vpop.f32.mrb[0].mxu0
    %v173 = vadd.f32 0.0, %v172
    %v174 = vpop.f32.mrb[0].mxu0
    %v175 = vpop.f32.mrb[0].mxu0
    %v176 = vpop.f32.mrb[0].mxu0
    %177 = vdwg.mxu0
    %v178 = vmax.f32 %v173, 0.0
    %v179 = vld [vmem:[#allocation2] sm:$0xff]
    %v180 = vld [vmem:[#allocation2 + $0x8] sm:$0xff]
    %v181 = vld [vmem:[#allocation2 + $0x10] sm:$0xff]
    %v182 = vld [vmem:[#allocation2 + $0x18] sm:$0xff]
    %v183 = vld [vmem:[#allocation2 + $0x20] sm:$0xff]
    %v184 = vld [vmem:[#allocation2 + $0x28] sm:$0xff]
    %v185 = vld [vmem:[#allocation2 + $0x30] sm:$0xff]
    %v186 = vld [vmem:[#allocation2 + $0x38] sm:$0xff]
    %v187 = vld [vmem:[#allocation2 + $0x40] sm:$0xff]
    %v188 = vld [vmem:[#allocation2 + $0x48] sm:$0xff]
    %v189 = vld [vmem:[#allocation2 + $0x50] sm:$0xff]
    %v190 = vld [vmem:[#allocation2 + $0x58] sm:$0xff]
    %v191 = vld [vmem:[#allocation2 + $0x60] sm:$0xff]
    %v192 = vld [vmem:[#allocation2 + $0x68] sm:$0xff]
    %v193 = vld [vmem:[#allocation2 + $0x70] sm:$0xff]
    %v194 = vld [vmem:[#allocation2 + $0x78] sm:$0xff]
    %v195 = vld [vmem:[#allocation2 + $0x80] sm:$0xff]
    %v196 = vld [vmem:[#allocation2 + $0x88] sm:$0xff]
    %v197 = vld [vmem:[#allocation2 + $0x90] sm:$0xff]
    %v198 = vld [vmem:[#allocation2 + $0x98] sm:$0xff]
    %v199 = vld [vmem:[#allocation2 + $0xa0] sm:$0xff]
    %v200 = vld [vmem:[#allocation2 + $0xa8] sm:$0xff]
    %v201 = vld [vmem:[#allocation2 + $0xb0] sm:$0xff]
    %v202 = vld [vmem:[#allocation2 + $0xb8] sm:$0xff]
    %v203 = vld [vmem:[#allocation2 + $0xc0] sm:$0xff]
    %v204 = vld [vmem:[#allocation2 + $0xc8] sm:$0xff]
    %v205 = vld [vmem:[#allocation2 + $0xd0] sm:$0xff]
    %v206 = vld [vmem:[#allocation2 + $0xd8] sm:$0xff]
    %v207 = vld [vmem:[#allocation2 + $0xe0] sm:$0xff]
    %v208 = vld [vmem:[#allocation2 + $0xe8] sm:$0xff]
    %v209 = vld [vmem:[#allocation2 + $0xf0] sm:$0xff]
    %v210 = vld [vmem:[#allocation2 + $0xf8] sm:$0xff]
    %v211 = vld [vmem:[#allocation2 + $0x100] sm:$0xff]
    %v212 = vld [vmem:[#allocation2 + $0x108] sm:$0xff]
    %v213 = vld [vmem:[#allocation2 + $0x110] sm:$0xff]
    %v214 = vld [vmem:[#allocation2 + $0x118] sm:$0xff]
    %v215 = vld [vmem:[#allocation2 + $0x120] sm:$0xff]
    %v216 = vld [vmem:[#allocation2 + $0x128] sm:$0xff]
    %v217 = vld [vmem:[#allocation2 + $0x130] sm:$0xff]
    %v218 = vld [vmem:[#allocation2 + $0x138] sm:$0xff]
    %v219 = vld [vmem:[#allocation2 + $0x140] sm:$0xff]
    %v220 = vld [vmem:[#allocation2 + $0x148] sm:$0xff]
    %v221 = vld [vmem:[#allocation2 + $0x150] sm:$0xff]
    %v222 = vld [vmem:[#allocation2 + $0x158] sm:$0xff]
    %v223 = vld [vmem:[#allocation2 + $0x160] sm:$0xff]
    %v224 = vld [vmem:[#allocation2 + $0x168] sm:$0xff]
    %v225 = vld [vmem:[#allocation2 + $0x170] sm:$0xff]
    %v226 = vld [vmem:[#allocation2 + $0x178] sm:$0xff]
    %v227 = vpack.c.bf16 %v178, %v178
    %v276 = vunpack.c.l.b16 %v179
    %v277 = vunpack.c.h.b16 %v179
    %v278 = vunpack.c.l.b16 %v180
    %v279 = vunpack.c.h.b16 %v180
    %v280 = vunpack.c.l.b16 %v181
    %v281 = vunpack.c.h.b16 %v181
    %v282 = vunpack.c.l.b16 %v182
    %v283 = vunpack.c.h.b16 %v182
    %v284 = vunpack.c.l.b16 %v183
    %v285 = vunpack.c.h.b16 %v183
    %v286 = vunpack.c.l.b16 %v184
    %v287 = vunpack.c.h.b16 %v184
    %v288 = vunpack.c.l.b16 %v185
    %v289 = vunpack.c.h.b16 %v185
    %v290 = vunpack.c.l.b16 %v186
    %v291 = vunpack.c.h.b16 %v186
    %v292 = vunpack.c.l.b16 %v187
    %v293 = vunpack.c.h.b16 %v187
    %v294 = vunpack.c.l.b16 %v188
    %v295 = vunpack.c.h.b16 %v188
    %v296 = vunpack.c.l.b16 %v189
    %v297 = vunpack.c.h.b16 %v189
    %v298 = vunpack.c.l.b16 %v190
    %v299 = vunpack.c.h.b16 %v190
    %v300 = vunpack.c.l.b16 %v191
    %v301 = vunpack.c.h.b16 %v191
    %v302 = vunpack.c.l.b16 %v192
    %v303 = vunpack.c.h.b16 %v192
    %v304 = vunpack.c.l.b16 %v193
    %v305 = vunpack.c.h.b16 %v193
    %v306 = vunpack.c.l.b16 %v194
    %v307 = vunpack.c.h.b16 %v194
    %v308 = vunpack.c.l.b16 %v195
    %v309 = vunpack.c.h.b16 %v195
    %v310 = vunpack.c.l.b16 %v196
    %v311 = vunpack.c.h.b16 %v196
    %v312 = vunpack.c.l.b16 %v197
    %v313 = vunpack.c.h.b16 %v197
    %v314 = vunpack.c.l.b16 %v198
    %v315 = vunpack.c.h.b16 %v198
    %v316 = vunpack.c.l.b16 %v199
    %v317 = vunpack.c.h.b16 %v199
    %v318 = vunpack.c.l.b16 %v200
    %v319 = vunpack.c.h.b16 %v200
    %v320 = vunpack.c.l.b16 %v201
    %v321 = vunpack.c.h.b16 %v201
    %v322 = vunpack.c.l.b16 %v202
    %v323 = vunpack.c.h.b16 %v202
    %v324 = vunpack.c.l.b16 %v203
    %v325 = vunpack.c.h.b16 %v203
    %v326 = vunpack.c.l.b16 %v204
    %v327 = vunpack.c.h.b16 %v204
    %v328 = vunpack.c.l.b16 %v205
    %v329 = vunpack.c.h.b16 %v205
    %v330 = vunpack.c.l.b16 %v206
    %v331 = vunpack.c.h.b16 %v206
    %v332 = vunpack.c.l.b16 %v207
    %v333 = vunpack.c.h.b16 %v207
    %v334 = vunpack.c.l.b16 %v208
    %v335 = vunpack.c.h.b16 %v208
    %v336 = vunpack.c.l.b16 %v209
    %v337 = vunpack.c.h.b16 %v209
    %v338 = vunpack.c.l.b16 %v210
    %v339 = vunpack.c.h.b16 %v210
    %v340 = vunpack.c.l.b16 %v211
    %v341 = vunpack.c.h.b16 %v211
    %v342 = vunpack.c.l.b16 %v212
    %v343 = vunpack.c.h.b16 %v212
    %v344 = vunpack.c.l.b16 %v213
    %v345 = vunpack.c.h.b16 %v213
    %v346 = vunpack.c.l.b16 %v214
    %v347 = vunpack.c.h.b16 %v214
    %v348 = vunpack.c.l.b16 %v215
    %v349 = vunpack.c.h.b16 %v215
    %v350 = vunpack.c.l.b16 %v216
    %v351 = vunpack.c.h.b16 %v216
    %v352 = vunpack.c.l.b16 %v217
    %v353 = vunpack.c.h.b16 %v217
    %v354 = vunpack.c.l.b16 %v218
    %v355 = vunpack.c.h.b16 %v218
    %v356 = vunpack.c.l.b16 %v219
    %v357 = vunpack.c.h.b16 %v219
    %v358 = vunpack.c.l.b16 %v220
    %v359 = vunpack.c.h.b16 %v220
    %v360 = vunpack.c.l.b16 %v221
    %v361 = vunpack.c.h.b16 %v221
    %v362 = vunpack.c.l.b16 %v222
    %v363 = vunpack.c.h.b16 %v222
    %v364 = vunpack.c.l.b16 %v223
    %v365 = vunpack.c.h.b16 %v223
    %v366 = vunpack.c.l.b16 %v224
    %v367 = vunpack.c.h.b16 %v224
    %v368 = vunpack.c.l.b16 %v225
    %v369 = vunpack.c.h.b16 %v225
    %v370 = vunpack.c.l.b16 %v226
    %v371 = vunpack.c.h.b16 %v226
    %v372 = vpack.c.b16 %v282, %v276
    %v373 = vpack.c.b16 %v283, %v277
    %v374 = vpack.c.b16 %v284, %v278
    %v375 = vpack.c.b16 %v285, %v279
    %v376 = vpack.c.b16 %v286, %v280
    %v377 = vpack.c.b16 %v287, %v281
    %v378 = vpack.c.b16 %v294, %v288
    %v379 = vpack.c.b16 %v295, %v289
    %v380 = vpack.c.b16 %v296, %v290
    %v381 = vpack.c.b16 %v297, %v291
    %v382 = vpack.c.b16 %v298, %v292
    %v383 = vpack.c.b16 %v299, %v293
    %v384 = vpack.c.b16 %v306, %v300
    %v385 = vpack.c.b16 %v307, %v301
    %v386 = vpack.c.b16 %v308, %v302
    %v387 = vpack.c.b16 %v309, %v303
    %v388 = vpack.c.b16 %v310, %v304
    %v389 = vpack.c.b16 %v311, %v305
    %v390 = vpack.c.b16 %v318, %v312
    %v391 = vpack.c.b16 %v319, %v313
    %v392 = vpack.c.b16 %v320, %v314
    %v393 = vpack.c.b16 %v321, %v315
    %v394 = vpack.c.b16 %v322, %v316
    %v395 = vpack.c.b16 %v323, %v317
    %v396 = vpack.c.b16 %v330, %v324
    %v397 = vpack.c.b16 %v331, %v325
    %v398 = vpack.c.b16 %v332, %v326
    %v399 = vpack.c.b16 %v333, %v327
    %v400 = vpack.c.b16 %v334, %v328
    %v401 = vpack.c.b16 %v335, %v329
    %v402 = vpack.c.b16 %v342, %v336
    %v403 = vpack.c.b16 %v343, %v337
    %v404 = vpack.c.b16 %v344, %v338
    %v405 = vpack.c.b16 %v345, %v339
    %v406 = vpack.c.b16 %v346, %v340
    %v407 = vpack.c.b16 %v347, %v341
    %v408 = vpack.c.b16 %v354, %v348
    %v409 = vpack.c.b16 %v355, %v349
    %v410 = vpack.c.b16 %v356, %v350
    %v411 = vpack.c.b16 %v357, %v351
    %v412 = vpack.c.b16 %v358, %v352
    %v413 = vpack.c.b16 %v359, %v353
    %v414 = vpack.c.b16 %v366, %v360
    %v415 = vpack.c.b16 %v367, %v361
    %v416 = vpack.c.b16 %v368, %v362
    %v417 = vpack.c.b16 %v369, %v363
    %v418 = vpack.c.b16 %v370, %v364
    %v419 = vpack.c.b16 %v371, %v365
    %468 = vmatprep.subr.bf16.mxu0 %v373
    %469 = vmatpush1.bf16.msra.mxu0 %v372
    %470 = vmatprep.subr.bf16.mxu0 %v379
    %471 = vmatpush1.bf16.msra.mxu0 %v378
    %472 = vmatprep.subr.bf16.mxu0 %v385
    %473 = vmatpush1.bf16.msra.mxu0 %v384
    %474 = vmatprep.subr.bf16.mxu0 %v391
    %475 = vmatpush1.bf16.msra.mxu0 %v390
    %476 = vmatprep.subr.bf16.mxu0 %v397
    %477 = vmatpush1.bf16.msra.mxu0 %v396
    %478 = vmatprep.subr.bf16.mxu0 %v403
    %479 = vmatpush1.bf16.msra.mxu0 %v402
    %480 = vmatprep.subr.bf16.mxu0 %v409
    %481 = vmatpush1.bf16.msra.mxu0 %v408
    %482 = vmatprep.subr.bf16.mxu0 %v415
    %483 = vmatpush1.bf16.msra.mxu0 %v414
    %484 = vmatprep.subr.bf16.mxu0 0
    %485 = vmatpush1.bf16.msra.mxu0 0
    %486 = vmatprep.subr.bf16.mxu0 0
    %487 = vmatpush1.bf16.msra.mxu0 0
    %488 = vmatprep.subr.bf16.mxu0 0
    %489 = vmatpush1.bf16.msra.mxu0 0
    %490 = vmatprep.subr.bf16.mxu0 0
    %491 = vmatpush1.bf16.msra.mxu0 0
    %492 = vmatprep.subr.bf16.mxu0 0
    %493 = vmatpush1.bf16.msra.mxu0 0
    %494 = vmatprep.subr.bf16.mxu0 0
    %495 = vmatpush1.bf16.msra.mxu0 0
    %496 = vmatprep.subr.bf16.mxu0 0
    %497 = vmatpush1.bf16.msra.mxu0 0
    %498 = vmatprep.subr.bf16.mxu0 0
    %499 = vmatpush1.bf16.msra.mxu0 0
    %500 = vmatprep.mubr.bf16.mxu0 0
    %501 = vmatmul.mubr.bf16.gmra.mrb[0].mxu0 %v227
    %v502 = vpop.f32.mrb[0].mxu0
    %v503 = vadd.f32 0.0, %v502
    %v504 = vpop.f32.mrb[0].mxu0
    %v505 = vadd.f32 0.0, %v504
    %v506 = vpop.f32.mrb[0].mxu0
    %v507 = vpop.f32.mrb[0].mxu0
    %508 = vdwg.mxu0
    %509 = vmatprep.subr.bf16.mxu0 %v375
    %510 = vmatpush1.bf16.msra.mxu0 %v374
    %511 = vmatprep.subr.bf16.mxu0 %v381
    %512 = vmatpush1.bf16.msra.mxu0 %v380
    %513 = vmatprep.subr.bf16.mxu0 %v387
    %514 = vmatpush1.bf16.msra.mxu0 %v386
    %515 = vmatprep.subr.bf16.mxu0 %v393
    %516 = vmatpush1.bf16.msra.mxu0 %v392
    %517 = vmatprep.subr.bf16.mxu0 %v399
    %518 = vmatpush1.bf16.msra.mxu0 %v398
    %519 = vmatprep.subr.bf16.mxu0 %v405
    %520 = vmatpush1.bf16.msra.mxu0 %v404
    %521 = vmatprep.subr.bf16.mxu0 %v411
    %522 = vmatpush1.bf16.msra.mxu0 %v410
    %523 = vmatprep.subr.bf16.mxu0 %v417
    %524 = vmatpush1.bf16.msra.mxu0 %v416
    %525 = vmatprep.subr.bf16.mxu0 0
    %526 = vmatpush1.bf16.msra.mxu0 0
    %527 = vmatprep.subr.bf16.mxu0 0
    %528 = vmatpush1.bf16.msra.mxu0 0
    %529 = vmatprep.subr.bf16.mxu0 0
    %530 = vmatpush1.bf16.msra.mxu0 0
    %531 = vmatprep.subr.bf16.mxu0 0
    %532 = vmatpush1.bf16.msra.mxu0 0
    %533 = vmatprep.subr.bf16.mxu0 0
    %534 = vmatpush1.bf16.msra.mxu0 0
    %535 = vmatprep.subr.bf16.mxu0 0
    %536 = vmatpush1.bf16.msra.mxu0 0
    %537 = vmatprep.subr.bf16.mxu0 0
    %538 = vmatpush1.bf16.msra.mxu0 0
    %539 = vmatprep.subr.bf16.mxu0 0
    %540 = vmatpush1.bf16.msra.mxu0 0
    %541 = vmatprep.mubr.bf16.mxu0 0
    %542 = vmatmul.mubr.bf16.gmra.mrb[0].mxu0 %v227
    %v543 = vpop.f32.mrb[0].mxu0
    %v544 = vadd.f32 0.0, %v543
    %v545 = vpop.f32.mrb[0].mxu0
    %v546 = vadd.f32 0.0, %v545
    %v547 = vpop.f32.mrb[0].mxu0
    %v548 = vpop.f32.mrb[0].mxu0
    %549 = vdwg.mxu0
    %550 = vmatprep.subr.bf16.mxu0 %v377
    %551 = vmatpush1.bf16.msra.mxu0 %v376
    %552 = vmatprep.subr.bf16.mxu0 %v383
    %553 = vmatpush1.bf16.msra.mxu0 %v382
    %554 = vmatprep.subr.bf16.mxu0 %v389
    %555 = vmatpush1.bf16.msra.mxu0 %v388
    %556 = vmatprep.subr.bf16.mxu0 %v395
    %557 = vmatpush1.bf16.msra.mxu0 %v394
    %558 = vmatprep.subr.bf16.mxu0 %v401
    %559 = vmatpush1.bf16.msra.mxu0 %v400
    %560 = vmatprep.subr.bf16.mxu0 %v407
    %561 = vmatpush1.bf16.msra.mxu0 %v406
    %562 = vmatprep.subr.bf16.mxu0 %v413
    %563 = vmatpush1.bf16.msra.mxu0 %v412
    %564 = vmatprep.subr.bf16.mxu0 %v419
    %565 = vmatpush1.bf16.msra.mxu0 %v418
    %566 = vmatprep.subr.bf16.mxu0 0
    %567 = vmatpush1.bf16.msra.mxu0 0
    %568 = vmatprep.subr.bf16.mxu0 0
    %569 = vmatpush1.bf16.msra.mxu0 0
    %570 = vmatprep.subr.bf16.mxu0 0
    %571 = vmatpush1.bf16.msra.mxu0 0
    %572 = vmatprep.subr.bf16.mxu0 0
    %573 = vmatpush1.bf16.msra.mxu0 0
    %574 = vmatprep.subr.bf16.mxu0 0
    %575 = vmatpush1.bf16.msra.mxu0 0
    %576 = vmatprep.subr.bf16.mxu0 0
    %577 = vmatpush1.bf16.msra.mxu0 0
    %578 = vmatprep.subr.bf16.mxu0 0
    %579 = vmatpush1.bf16.msra.mxu0 0
    %580 = vmatprep.subr.bf16.mxu0 0
    %581 = vmatpush1.bf16.msra.mxu0 0
    %582 = vmatprep.mubr.bf16.mxu0 0
    %583 = vmatmul.mubr.bf16.gmra.mrb[0].mxu0 %v227
    %v584 = vpop.f32.mrb[0].mxu0
    %v585 = vadd.f32 0.0, %v584
    %v586 = vpop.f32.mrb[0].mxu0
    %v587 = vadd.f32 0.0, %v586
    %v588 = vpop.f32.mrb[0].mxu0
    %v589 = vpop.f32.mrb[0].mxu0
    %590 = vdwg.mxu0
    %v591 = vld [vmem:[%s6] ss:$8 sm:$0x3]
    %s592 = scalar_lea.vmem %s6, 1
    %v593 = vld [vmem:[%s592] ss:$8 sm:$0x3]
    %v594 = vadd.f32 %v503, %v544
    %v595 = vadd.f32 %v594, %v585
    %v596 = vrot.slane %v595, 4
    %v597 = vadd.f32 %v595, %v596
    %v598 = vrot.slane %v597, 2
    %v599 = vadd.f32 %v597, %v598
    %v600 = vrot.slane %v599, 1
    %v601 = vadd.f32 %v599, %v600
    %v602 = vadd.f32 %v505, %v546
    %v603 = vadd.f32 %v602, %v587
    %v604 = vrot.slane %v603, 4
    %v605 = vadd.f32 %v603, %v604
    %v606 = vrot.slane %v605, 2
    %v607 = vadd.f32 %v605, %v606
    %v608 = vrot.slane %v607, 1
    %v609 = vadd.f32 %v607, %v608
    %v610 = vmul.f32 %v503, %v503
    %v611 = vmul.f32 %v505, %v505
    %v612 = vmul.f32 %v544, %v544
    %v613 = vmul.f32 %v546, %v546
    %v614 = vmul.f32 %v585, %v585
    %v615 = vmul.f32 %v587, %v587
    %v616 = vadd.f32 %v610, %v612
    %v617 = vadd.f32 %v616, %v614
    %v618 = vrot.slane %v617, 4
    %v619 = vadd.f32 %v617, %v618
    %v620 = vrot.slane %v619, 2
    %v621 = vadd.f32 %v619, %v620
    %v622 = vrot.slane %v621, 1
    %v623 = vadd.f32 %v621, %v622
    %v624 = vadd.f32 %v611, %v613
    %v625 = vadd.f32 %v624, %v615
    %v626 = vrot.slane %v625, 4
    %v627 = vadd.f32 %v625, %v626
    %v628 = vrot.slane %v627, 2
    %v629 = vadd.f32 %v627, %v628
    %v630 = vrot.slane %v629, 1
    %v631 = vadd.f32 %v629, %v630
    %v632 = vmul.f32 %v601, 0.041666668
    %v633 = vmul.f32 %v609, 0.041666668
    %v634 = vmul.f32 %v623, 0.041666668
    %v635 = vmul.f32 %v631, 0.041666668
    %v636 = vmul.f32 %v632, %v632
    %v637 = vmul.f32 %v633, %v633
    %v638 = vsub.f32 %v634, %v636
    %v639 = vsub.f32 %v635, %v637
    %v640 = vadd.f32 %v638, 0.8
    %v641 = vadd.f32 %v639, 0.8
    %v642 = vrsqrt.pop %v640
    %v643 = vrsqrt.pop %v641
    %v645 = vlaneseq
    %v646 = vshrl.u32 %v645, 7
    %v647 = vsub.s32 0, %v646
    %v648 = vrot.slane %v591, %v647
    %v649 = vlaneseq
    %v650 = vshrl.u32 %v649, 7
    %v651 = vsub.s32 1, %v650
    %v652 = vrot.slane %v591, %v651
    %v655 = vmul.f32 %v642, %v648
    %v656 = vmul.f32 %v643, %v652
    %v657 = vmul.f32 %v632, %v655
    %v658 = vmul.f32 %v633, %v656
    %v661 = vcombine.low %v657, %v658
    %v663 = vunpack.c.l.s4 1966171168
    %v664 = vunpack.c.0.s8 %v663
    %v665 = vlaneseq
    %v666 = vshrl.u32 %v665, 7
    %v667 = vsub.s32 %v664, %v666
    %v668 = vrot.slane %v661, %v667
    %v670 = vunpack.c.l.s4 1966171168
    %v671 = vunpack.c.0.s8 %v670
    %v672 = vlaneseq
    %v673 = vshrl.u32 %v672, 7
    %v674 = vsub.s32 %v671, %v673
    %v675 = vrot.slane %v668, %v674
    %v677 = vsub.f32 %v593, %v675
    %v678 = vlaneseq
    %v679 = vshrl.u32 %v678, 7
    %v680 = vsub.s32 0, %v679
    %v681 = vrot.slane %v655, %v680
    %v682 = vlaneseq
    %v683 = vshrl.u32 %v682, 7
    %v684 = vsub.s32 0, %v683
    %v685 = vrot.slane %v656, %v684
    %v686 = vmul.f32 %v503, %v681
    %v687 = vmul.f32 %v505, %v685
    %v688 = vmul.f32 %v544, %v681
    %v689 = vmul.f32 %v546, %v685
    %v690 = vmul.f32 %v585, %v681
    %v691 = vmul.f32 %v587, %v685
    %v693 = vlaneseq
    %v694 = vshrl.u32 %v693, 7
    %v695 = vsub.s32 0, %v694
    %v696 = vrot.slane %v677, %v695
    %v697 = vlaneseq
    %v698 = vshrl.u32 %v697, 7
    %v699 = vsub.s32 1, %v698
    %v700 = vrot.slane %v677, %v699
    %v703 = vadd.f32 %v686, %v696
    %v704 = vadd.f32 %v687, %v700
    %v705 = vadd.f32 %v688, %v696
    %v706 = vadd.f32 %v689, %v700
    %v707 = vadd.f32 %v690, %v696
    %v708 = vadd.f32 %v691, %v700
    %v709 = vmax.f32 %v703, 0.0
    %v710 = vmax.f32 %v704, 0.0
    %v711 = vmax.f32 %v705, 0.0
    %v712 = vmax.f32 %v706, 0.0
    %v713 = vmax.f32 %v707, 0.0
    %v714 = vmax.f32 %v708, 0.0
    %v715 = vld [vmem:[#allocation4] sm:$0xff]
    %v716 = vld [vmem:[#allocation4 + $0x8] sm:$0xff]
    %v717 = vld [vmem:[#allocation4 + $0x10] sm:$0xff]
    %v718 = vld [vmem:[#allocation4 + $0x18] sm:$0xff]
    %v719 = vld [vmem:[#allocation4 + $0x20] sm:$0xff]
    %v720 = vld [vmem:[#allocation4 + $0x28] sm:$0xff]
    %v721 = vld [vmem:[#allocation4 + $0x30] sm:$0xff]
    %v722 = vld [vmem:[#allocation4 + $0x38] sm:$0xff]
    %v723 = vld [vmem:[#allocation4 + $0x40] sm:$0xff]
    %v724 = vld [vmem:[#allocation4 + $0x48] sm:$0xff]
    %v725 = vld [vmem:[#allocation4 + $0x50] sm:$0xff]
    %v726 = vld [vmem:[#allocation4 + $0x58] sm:$0xff]
    %v727 = vld [vmem:[#allocation4 + $0x60] sm:$0xff]
    %v728 = vld [vmem:[#allocation4 + $0x68] sm:$0xff]
    %v729 = vld [vmem:[#allocation4 + $0x70] sm:$0xff]
    %v730 = vld [vmem:[#allocation4 + $0x78] sm:$0xff]
    %v731 = vld [vmem:[#allocation4 + $0x80] sm:$0xff]
    %v732 = vld [vmem:[#allocation4 + $0x88] sm:$0xff]
    %v733 = vld [vmem:[#allocation4 + $0x90] sm:$0xff]
    %v734 = vld [vmem:[#allocation4 + $0x98] sm:$0xff]
    %v735 = vld [vmem:[#allocation4 + $0xa0] sm:$0xff]
    %v736 = vld [vmem:[#allocation4 + $0xa8] sm:$0xff]
    %v737 = vld [vmem:[#allocation4 + $0xb0] sm:$0xff]
    %v738 = vld [vmem:[#allocation4 + $0xb8] sm:$0xff]
    %v739 = vld [vmem:[#allocation4 + $0xc0] sm:$0xff]
    %v740 = vld [vmem:[#allocation4 + $0xc8] sm:$0xff]
    %v741 = vld [vmem:[#allocation4 + $0xd0] sm:$0xff]
    %v742 = vld [vmem:[#allocation4 + $0xd8] sm:$0xff]
    %v743 = vld [vmem:[#allocation4 + $0xe0] sm:$0xff]
    %v744 = vld [vmem:[#allocation4 + $0xe8] sm:$0xff]
    %v745 = vld [vmem:[#allocation4 + $0xf0] sm:$0xff]
    %v746 = vld [vmem:[#allocation4 + $0xf8] sm:$0xff]
    %v747 = vld [vmem:[#allocation4 + $0x100] sm:$0xff]
    %v748 = vld [vmem:[#allocation4 + $0x108] sm:$0xff]
    %v749 = vld [vmem:[#allocation4 + $0x110] sm:$0xff]
    %v750 = vld [vmem:[#allocation4 + $0x118] sm:$0xff]
    %v751 = vld [vmem:[#allocation4 + $0x120] sm:$0xff]
    %v752 = vld [vmem:[#allocation4 + $0x128] sm:$0xff]
    %v753 = vld [vmem:[#allocation4 + $0x130] sm:$0xff]
    %v754 = vld [vmem:[#allocation4 + $0x138] sm:$0xff]
    %v755 = vld [vmem:[#allocation4 + $0x140] sm:$0xff]
    %v756 = vld [vmem:[#allocation4 + $0x148] sm:$0xff]
    %v757 = vld [vmem:[#allocation4 + $0x150] sm:$0xff]
    %v758 = vld [vmem:[#allocation4 + $0x158] sm:$0xff]
    %v759 = vld [vmem:[#allocation4 + $0x160] sm:$0xff]
    %v760 = vld [vmem:[#allocation4 + $0x168] sm:$0xff]
    %v761 = vld [vmem:[#allocation4 + $0x170] sm:$0xff]
    %v762 = vld [vmem:[#allocation4 + $0x178] sm:$0xff]
    %v763 = vld [vmem:[#allocation4 + $0x180] sm:$0xff]
    %v764 = vld [vmem:[#allocation4 + $0x188] sm:$0xff]
    %v765 = vld [vmem:[#allocation4 + $0x190] sm:$0xff]
    %v766 = vld [vmem:[#allocation4 + $0x198] sm:$0xff]
    %v767 = vld [vmem:[#allocation4 + $0x1a0] sm:$0xff]
    %v768 = vld [vmem:[#allocation4 + $0x1a8] sm:$0xff]
    %v769 = vld [vmem:[#allocation4 + $0x1b0] sm:$0xff]
    %v770 = vld [vmem:[#allocation4 + $0x1b8] sm:$0xff]
    %v771 = vld [vmem:[#allocation4 + $0x1c0] sm:$0xff]
    %v772 = vld [vmem:[#allocation4 + $0x1c8] sm:$0xff]
    %v773 = vld [vmem:[#allocation4 + $0x1d0] sm:$0xff]
    %v774 = vld [vmem:[#allocation4 + $0x1d8] sm:$0xff]
    %v775 = vld [vmem:[#allocation4 + $0x1e0] sm:$0xff]
    %v776 = vld [vmem:[#allocation4 + $0x1e8] sm:$0xff]
    %v777 = vld [vmem:[#allocation4 + $0x1f0] sm:$0xff]
    %v778 = vld [vmem:[#allocation4 + $0x1f8] sm:$0xff]
    %v779 = vpack.c.bf16 %v711, %v709
    %v780 = vpack.c.bf16 %v712, %v710
    %v781 = vpack.c.bf16 %v713, %v713
    %v782 = vpack.c.bf16 %v714, %v714
    %v847 = vunpack.c.l.b16 %v715
    %v848 = vunpack.c.h.b16 %v715
    %v849 = vunpack.c.l.b16 %v716
    %v850 = vunpack.c.h.b16 %v716
    %v851 = vunpack.c.l.b16 %v717
    %v852 = vunpack.c.h.b16 %v717
    %v853 = vunpack.c.l.b16 %v718
    %v854 = vunpack.c.h.b16 %v718
    %v855 = vunpack.c.l.b16 %v719
    %v856 = vunpack.c.h.b16 %v719
    %v857 = vunpack.c.l.b16 %v720
    %v858 = vunpack.c.h.b16 %v720
    %v859 = vunpack.c.l.b16 %v721
    %v860 = vunpack.c.h.b16 %v721
    %v861 = vunpack.c.l.b16 %v722
    %v862 = vunpack.c.h.b16 %v722
    %v863 = vunpack.c.l.b16 %v723
    %v864 = vunpack.c.h.b16 %v723
    %v865 = vunpack.c.l.b16 %v724
    %v866 = vunpack.c.h.b16 %v724
    %v867 = vunpack.c.l.b16 %v725
    %v868 = vunpack.c.h.b16 %v725
    %v869 = vunpack.c.l.b16 %v726
    %v870 = vunpack.c.h.b16 %v726
    %v871 = vunpack.c.l.b16 %v727
    %v872 = vunpack.c.h.b16 %v727
    %v873 = vunpack.c.l.b16 %v728
    %v874 = vunpack.c.h.b16 %v728
    %v875 = vunpack.c.l.b16 %v729
    %v876 = vunpack.c.h.b16 %v729
    %v877 = vunpack.c.l.b16 %v730
    %v878 = vunpack.c.h.b16 %v730
    %v879 = vunpack.c.l.b16 %v731
    %v880 = vunpack.c.h.b16 %v731
    %v881 = vunpack.c.l.b16 %v732
    %v882 = vunpack.c.h.b16 %v732
    %v883 = vunpack.c.l.b16 %v733
    %v884 = vunpack.c.h.b16 %v733
    %v885 = vunpack.c.l.b16 %v734
    %v886 = vunpack.c.h.b16 %v734
    %v887 = vunpack.c.l.b16 %v735
    %v888 = vunpack.c.h.b16 %v735
    %v889 = vunpack.c.l.b16 %v736
    %v890 = vunpack.c.h.b16 %v736
    %v891 = vunpack.c.l.b16 %v737
    %v892 = vunpack.c.h.b16 %v737
    %v893 = vunpack.c.l.b16 %v738
    %v894 = vunpack.c.h.b16 %v738
    %v895 = vunpack.c.l.b16 %v739
    %v896 = vunpack.c.h.b16 %v739
    %v897 = vunpack.c.l.b16 %v740
    %v898 = vunpack.c.h.b16 %v740
    %v899 = vunpack.c.l.b16 %v741
    %v900 = vunpack.c.h.b16 %v741
    %v901 = vunpack.c.l.b16 %v742
    %v902 = vunpack.c.h.b16 %v742
    %v903 = vunpack.c.l.b16 %v743
    %v904 = vunpack.c.h.b16 %v743
    %v905 = vunpack.c.l.b16 %v744
    %v906 = vunpack.c.h.b16 %v744
    %v907 = vunpack.c.l.b16 %v745
    %v908 = vunpack.c.h.b16 %v745
    %v909 = vunpack.c.l.b16 %v746
    %v910 = vunpack.c.h.b16 %v746
    %v911 = vunpack.c.l.b16 %v747
    %v912 = vunpack.c.h.b16 %v747
    %v913 = vunpack.c.l.b16 %v748
    %v914 = vunpack.c.h.b16 %v748
    %v915 = vunpack.c.l.b16 %v749
    %v916 = vunpack.c.h.b16 %v749
    %v917 = vunpack.c.l.b16 %v750
    %v918 = vunpack.c.h.b16 %v750
    %v919 = vunpack.c.l.b16 %v751
    %v920 = vunpack.c.h.b16 %v751
    %v921 = vunpack.c.l.b16 %v752
    %v922 = vunpack.c.h.b16 %v752
    %v923 = vunpack.c.l.b16 %v753
    %v924 = vunpack.c.h.b16 %v753
    %v925 = vunpack.c.l.b16 %v754
    %v926 = vunpack.c.h.b16 %v754
    %v927 = vunpack.c.l.b16 %v755
    %v928 = vunpack.c.h.b16 %v755
    %v929 = vunpack.c.l.b16 %v756
    %v930 = vunpack.c.h.b16 %v756
    %v931 = vunpack.c.l.b16 %v757
    %v932 = vunpack.c.h.b16 %v757
    %v933 = vunpack.c.l.b16 %v758
    %v934 = vunpack.c.h.b16 %v758
    %v935 = vunpack.c.l.b16 %v759
    %v936 = vunpack.c.h.b16 %v759
    %v937 = vunpack.c.l.b16 %v760
    %v938 = vunpack.c.h.b16 %v760
    %v939 = vunpack.c.l.b16 %v761
    %v940 = vunpack.c.h.b16 %v761
    %v941 = vunpack.c.l.b16 %v762
    %v942 = vunpack.c.h.b16 %v762
    %v943 = vunpack.c.l.b16 %v763
    %v944 = vunpack.c.h.b16 %v763
    %v945 = vunpack.c.l.b16 %v764
    %v946 = vunpack.c.h.b16 %v764
    %v947 = vunpack.c.l.b16 %v765
    %v948 = vunpack.c.h.b16 %v765
    %v949 = vunpack.c.l.b16 %v766
    %v950 = vunpack.c.h.b16 %v766
    %v951 = vunpack.c.l.b16 %v767
    %v952 = vunpack.c.h.b16 %v767
    %v953 = vunpack.c.l.b16 %v768
    %v954 = vunpack.c.h.b16 %v768
    %v955 = vunpack.c.l.b16 %v769
    %v956 = vunpack.c.h.b16 %v769
    %v957 = vunpack.c.l.b16 %v770
    %v958 = vunpack.c.h.b16 %v770
    %v959 = vunpack.c.l.b16 %v771
    %v960 = vunpack.c.h.b16 %v771
    %v961 = vunpack.c.l.b16 %v772
    %v962 = vunpack.c.h.b16 %v772
    %v963 = vunpack.c.l.b16 %v773
    %v964 = vunpack.c.h.b16 %v773
    %v965 = vunpack.c.l.b16 %v774
    %v966 = vunpack.c.h.b16 %v774
    %v967 = vunpack.c.l.b16 %v775
    %v968 = vunpack.c.h.b16 %v775
    %v969 = vunpack.c.l.b16 %v776
    %v970 = vunpack.c.h.b16 %v776
    %v971 = vunpack.c.l.b16 %v777
    %v972 = vunpack.c.h.b16 %v777
    %v973 = vunpack.c.l.b16 %v778
    %v974 = vunpack.c.h.b16 %v778
    %v975 = vpack.c.b16 %v851, %v847
    %v976 = vpack.c.b16 %v852, %v848
    %v977 = vpack.c.b16 %v853, %v849
    %v978 = vpack.c.b16 %v854, %v850
    %v979 = vpack.c.b16 %v859, %v855
    %v980 = vpack.c.b16 %v860, %v856
    %v981 = vpack.c.b16 %v861, %v857
    %v982 = vpack.c.b16 %v862, %v858
    %v983 = vpack.c.b16 %v867, %v863
    %v984 = vpack.c.b16 %v868, %v864
    %v985 = vpack.c.b16 %v869, %v865
    %v986 = vpack.c.b16 %v870, %v866
    %v987 = vpack.c.b16 %v875, %v871
    %v988 = vpack.c.b16 %v876, %v872
    %v989 = vpack.c.b16 %v877, %v873
    %v990 = vpack.c.b16 %v878, %v874
    %v991 = vpack.c.b16 %v883, %v879
    %v992 = vpack.c.b16 %v884, %v880
    %v993 = vpack.c.b16 %v885, %v881
    %v994 = vpack.c.b16 %v886, %v882
    %v995 = vpack.c.b16 %v891, %v887
    %v996 = vpack.c.b16 %v892, %v888
    %v997 = vpack.c.b16 %v893, %v889
    %v998 = vpack.c.b16 %v894, %v890
    %v999 = vpack.c.b16 %v899, %v895
    %v1000 = vpack.c.b16 %v900, %v896
    %v1001 = vpack.c.b16 %v901, %v897
    %v1002 = vpack.c.b16 %v902, %v898
    %v1003 = vpack.c.b16 %v907, %v903
    %v1004 = vpack.c.b16 %v908, %v904
    %v1005 = vpack.c.b16 %v909, %v905
    %v1006 = vpack.c.b16 %v910, %v906
    %v1007 = vpack.c.b16 %v915, %v911
    %v1008 = vpack.c.b16 %v916, %v912
    %v1009 = vpack.c.b16 %v917, %v913
    %v1010 = vpack.c.b16 %v918, %v914
    %v1011 = vpack.c.b16 %v923, %v919
    %v1012 = vpack.c.b16 %v924, %v920
    %v1013 = vpack.c.b16 %v925, %v921
    %v1014 = vpack.c.b16 %v926, %v922
    %v1015 = vpack.c.b16 %v931, %v927
    %v1016 = vpack.c.b16 %v932, %v928
    %v1017 = vpack.c.b16 %v933, %v929
    %v1018 = vpack.c.b16 %v934, %v930
    %v1019 = vpack.c.b16 %v939, %v935
    %v1020 = vpack.c.b16 %v940, %v936
    %v1021 = vpack.c.b16 %v941, %v937
    %v1022 = vpack.c.b16 %v942, %v938
    %v1023 = vpack.c.b16 %v947, %v943
    %v1024 = vpack.c.b16 %v948, %v944
    %v1025 = vpack.c.b16 %v949, %v945
    %v1026 = vpack.c.b16 %v950, %v946
    %v1027 = vpack.c.b16 %v955, %v951
    %v1028 = vpack.c.b16 %v956, %v952
    %v1029 = vpack.c.b16 %v957, %v953
    %v1030 = vpack.c.b16 %v958, %v954
    %v1031 = vpack.c.b16 %v963, %v959
    %v1032 = vpack.c.b16 %v964, %v960
    %v1033 = vpack.c.b16 %v965, %v961
    %v1034 = vpack.c.b16 %v966, %v962
    %v1035 = vpack.c.b16 %v971, %v967
    %v1036 = vpack.c.b16 %v972, %v968
    %v1037 = vpack.c.b16 %v973, %v969
    %v1038 = vpack.c.b16 %v974, %v970
    %1103 = vmatprep.subr.bf16.mxu0 %v976
    %1104 = vmatpush1.bf16.msra.mxu0 %v975
    %1105 = vmatprep.subr.bf16.mxu0 %v980
    %1106 = vmatpush1.bf16.msra.mxu0 %v979
    %1107 = vmatprep.subr.bf16.mxu0 %v984
    %1108 = vmatpush1.bf16.msra.mxu0 %v983
    %1109 = vmatprep.subr.bf16.mxu0 %v988
    %1110 = vmatpush1.bf16.msra.mxu0 %v987
    %1111 = vmatprep.subr.bf16.mxu0 %v992
    %1112 = vmatpush1.bf16.msra.mxu0 %v991
    %1113 = vmatprep.subr.bf16.mxu0 %v996
    %1114 = vmatpush1.bf16.msra.mxu0 %v995
    %1115 = vmatprep.subr.bf16.mxu0 %v1000
    %1116 = vmatpush1.bf16.msra.mxu0 %v999
    %1117 = vmatprep.subr.bf16.mxu0 %v1004
    %1118 = vmatpush1.bf16.msra.mxu0 %v1003
    %1119 = vmatprep.subr.bf16.mxu0 %v1008
    %1120 = vmatpush1.bf16.msra.mxu0 %v1007
    %1121 = vmatprep.subr.bf16.mxu0 %v1012
    %1122 = vmatpush1.bf16.msra.mxu0 %v1011
    %1123 = vmatprep.subr.bf16.mxu0 %v1016
    %1124 = vmatpush1.bf16.msra.mxu0 %v1015
    %1125 = vmatprep.subr.bf16.mxu0 %v1020
    %1126 = vmatpush1.bf16.msra.mxu0 %v1019
    %1127 = vmatprep.subr.bf16.mxu0 %v1024
    %1128 = vmatpush1.bf16.msra.mxu0 %v1023
    %1129 = vmatprep.subr.bf16.mxu0 %v1028
    %1130 = vmatpush1.bf16.msra.mxu0 %v1027
    %1131 = vmatprep.subr.bf16.mxu0 %v1032
    %1132 = vmatpush1.bf16.msra.mxu0 %v1031
    %1133 = vmatprep.subr.bf16.mxu0 %v1036
    %1134 = vmatpush1.bf16.msra.mxu0 %v1035
    %1135 = vmatprep.mubr.bf16.mxu0 %v780
    %1136 = vmatmul.mubr.bf16.gmra.mrb[0].mxu0 %v779
    %v1137 = vpop.f32.mrb[0].mxu0
    %v1138 = vadd.f32 0.0, %v1137
    %v1139 = vpop.f32.mrb[0].mxu0
    %v1140 = vadd.f32 0.0, %v1139
    %v1141 = vpop.f32.mrb[0].mxu0
    %v1142 = vadd.f32 0.0, %v1141
    %v1143 = vpop.f32.mrb[0].mxu0
    %v1144 = vadd.f32 0.0, %v1143
    %1145 = vmatprep.mubr.bf16.mxu0 %v782
    %1146 = vmatmul.mubr.bf16.gmra.mrb[0].mxu0 %v781
    %v1147 = vpop.f32.mrb[0].mxu0
    %v1148 = vadd.f32 0.0, %v1147
    %v1149 = vpop.f32.mrb[0].mxu0
    %v1150 = vadd.f32 0.0, %v1149
    %v1151 = vpop.f32.mrb[0].mxu0
    %v1152 = vpop.f32.mrb[0].mxu0
    %1153 = vdwg.mxu0
    %1154 = vmatprep.subr.bf16.mxu0 %v978
    %1155 = vmatpush1.bf16.msra.mxu0 %v977
    %1156 = vmatprep.subr.bf16.mxu0 %v982
    %1157 = vmatpush1.bf16.msra.mxu0 %v981
    %1158 = vmatprep.subr.bf16.mxu0 %v986
    %1159 = vmatpush1.bf16.msra.mxu0 %v985
    %1160 = vmatprep.subr.bf16.mxu0 %v990
    %1161 = vmatpush1.bf16.msra.mxu0 %v989
    %1162 = vmatprep.subr.bf16.mxu0 %v994
    %1163 = vmatpush1.bf16.msra.mxu0 %v993
    %1164 = vmatprep.subr.bf16.mxu0 %v998
    %1165 = vmatpush1.bf16.msra.mxu0 %v997
    %1166 = vmatprep.subr.bf16.mxu0 %v1002
    %1167 = vmatpush1.bf16.msra.mxu0 %v1001
    %1168 = vmatprep.subr.bf16.mxu0 %v1006
    %1169 = vmatpush1.bf16.msra.mxu0 %v1005
    %1170 = vmatprep.subr.bf16.mxu0 %v1010
    %1171 = vmatpush1.bf16.msra.mxu0 %v1009
    %1172 = vmatprep.subr.bf16.mxu0 %v1014
    %1173 = vmatpush1.bf16.msra.mxu0 %v1013
    %1174 = vmatprep.subr.bf16.mxu0 %v1018
    %1175 = vmatpush1.bf16.msra.mxu0 %v1017
    %1176 = vmatprep.subr.bf16.mxu0 %v1022
    %1177 = vmatpush1.bf16.msra.mxu0 %v1021
    %1178 = vmatprep.subr.bf16.mxu0 %v1026
    %1179 = vmatpush1.bf16.msra.mxu0 %v1025
    %1180 = vmatprep.subr.bf16.mxu0 %v1030
    %1181 = vmatpush1.bf16.msra.mxu0 %v1029
    %1182 = vmatprep.subr.bf16.mxu0 %v1034
    %1183 = vmatpush1.bf16.msra.mxu0 %v1033
    %1184 = vmatprep.subr.bf16.mxu0 %v1038
    %1185 = vmatpush1.bf16.msra.mxu0 %v1037
    %1186 = vmatprep.mubr.bf16.mxu0 %v780
    %1187 = vmatmul.mubr.bf16.gmra.mrb[0].mxu0 %v779
    %v1188 = vpop.f32.mrb[0].mxu0
    %v1189 = vadd.f32 0.0, %v1188
    %v1190 = vpop.f32.mrb[0].mxu0
    %v1191 = vadd.f32 0.0, %v1190
    %v1192 = vpop.f32.mrb[0].mxu0
    %v1193 = vadd.f32 0.0, %v1192
    %v1194 = vpop.f32.mrb[0].mxu0
    %v1195 = vadd.f32 0.0, %v1194
    %1196 = vmatprep.mubr.bf16.mxu0 %v782
    %1197 = vmatmul.mubr.bf16.gmra.mrb[0].mxu0 %v781
    %v1198 = vpop.f32.mrb[0].mxu0
    %v1199 = vadd.f32 0.0, %v1198
    %v1200 = vpop.f32.mrb[0].mxu0
    %v1201 = vadd.f32 0.0, %v1200
    %v1202 = vpop.f32.mrb[0].mxu0
    %v1203 = vpop.f32.mrb[0].mxu0
    %1204 = vdwg.mxu0
    %s1205 = scalar_lea.vmem %s6, 2
    %v1206 = vld [vmem:[%s1205] ss:$8 sm:$0xf]
    %s1207 = scalar_lea.vmem %s6, 3
    %v1208 = vld [vmem:[%s1207] ss:$8 sm:$0xf]
    %v1209 = vadd.f32 %v1138, %v1142
    %v1210 = vadd.f32 %v1209, %v1148
    %v1211 = vrot.slane %v1210, 4
    %v1212 = vadd.f32 %v1210, %v1211
    %v1213 = vrot.slane %v1212, 2
    %v1214 = vadd.f32 %v1212, %v1213
    %v1215 = vrot.slane %v1214, 1
    %v1216 = vadd.f32 %v1214, %v1215
    %v1217 = vadd.f32 %v1140, %v1144
    %v1218 = vadd.f32 %v1217, %v1150
    %v1219 = vrot.slane %v1218, 4
    %v1220 = vadd.f32 %v1218, %v1219
    %v1221 = vrot.slane %v1220, 2
    %v1222 = vadd.f32 %v1220, %v1221
    %v1223 = vrot.slane %v1222, 1
    %v1224 = vadd.f32 %v1222, %v1223
    %v1225 = vadd.f32 %v1189, %v1193
    %v1226 = vadd.f32 %v1225, %v1199
    %v1227 = vrot.slane %v1226, 4
    %v1228 = vadd.f32 %v1226, %v1227
    %v1229 = vrot.slane %v1228, 2
    %v1230 = vadd.f32 %v1228, %v1229
    %v1231 = vrot.slane %v1230, 1
    %v1232 = vadd.f32 %v1230, %v1231
    %v1233 = vadd.f32 %v1191, %v1195
    %v1234 = vadd.f32 %v1233, %v1201
    %v1235 = vrot.slane %v1234, 4
    %v1236 = vadd.f32 %v1234, %v1235
    %v1237 = vrot.slane %v1236, 2
    %v1238 = vadd.f32 %v1236, %v1237
    %v1239 = vrot.slane %v1238, 1
    %v1240 = vadd.f32 %v1238, %v1239
    %v1241 = vmul.f32 %v1138, %v1138
    %v1242 = vmul.f32 %v1140, %v1140
    %v1243 = vmul.f32 %v1189, %v1189
    %v1244 = vmul.f32 %v1191, %v1191
    %v1245 = vmul.f32 %v1142, %v1142
    %v1246 = vmul.f32 %v1144, %v1144
    %v1247 = vmul.f32 %v1193, %v1193
    %v1248 = vmul.f32 %v1195, %v1195
    %v1249 = vmul.f32 %v1148, %v1148
    %v1250 = vmul.f32 %v1150, %v1150
    %v1251 = vmul.f32 %v1199, %v1199
    %v1252 = vmul.f32 %v1201, %v1201
    %v1253 = vadd.f32 %v1241, %v1245
    %v1254 = vadd.f32 %v1253, %v1249
    %v1255 = vrot.slane %v1254, 4
    %v1256 = vadd.f32 %v1254, %v1255
    %v1257 = vrot.slane %v1256, 2
    %v1258 = vadd.f32 %v1256, %v1257
    %v1259 = vrot.slane %v1258, 1
    %v1260 = vadd.f32 %v1258, %v1259
    %v1261 = vadd.f32 %v1242, %v1246
    %v1262 = vadd.f32 %v1261, %v1250
    %v1263 = vrot.slane %v1262, 4
    %v1264 = vadd.f32 %v1262, %v1263
    %v1265 = vrot.slane %v1264, 2
    %v1266 = vadd.f32 %v1264, %v1265
    %v1267 = vrot.slane %v1266, 1
    %v1268 = vadd.f32 %v1266, %v1267
    %v1269 = vadd.f32 %v1243, %v1247
    %v1270 = vadd.f32 %v1269, %v1251
    %v1271 = vrot.slane %v1270, 4
    %v1272 = vadd.f32 %v1270, %v1271
    %v1273 = vrot.slane %v1272, 2
    %v1274 = vadd.f32 %v1272, %v1273
    %v1275 = vrot.slane %v1274, 1
    %v1276 = vadd.f32 %v1274, %v1275
    %v1277 = vadd.f32 %v1244, %v1248
    %v1278 = vadd.f32 %v1277, %v1252
    %v1279 = vrot.slane %v1278, 4
    %v1280 = vadd.f32 %v1278, %v1279
    %v1281 = vrot.slane %v1280, 2
    %v1282 = vadd.f32 %v1280, %v1281
    %v1283 = vrot.slane %v1282, 1
    %v1284 = vadd.f32 %v1282, %v1283
    %v1285 = vmul.f32 %v1216, 0.041666668
    %v1286 = vmul.f32 %v1224, 0.041666668
    %v1287 = vmul.f32 %v1232, 0.041666668
    %v1288 = vmul.f32 %v1240, 0.041666668
    %v1289 = vmul.f32 %v1260, 0.041666668
    %v1290 = vmul.f32 %v1268, 0.041666668
    %v1291 = vmul.f32 %v1276, 0.041666668
    %v1292 = vmul.f32 %v1284, 0.041666668
    %v1293 = vmul.f32 %v1285, %v1285
    %v1294 = vmul.f32 %v1286, %v1286
    %v1295 = vmul.f32 %v1287, %v1287
    %v1296 = vmul.f32 %v1288, %v1288
    %v1297 = vsub.f32 %v1289, %v1293
    %v1298 = vsub.f32 %v1290, %v1294
    %v1299 = vsub.f32 %v1291, %v1295
    %v1300 = vsub.f32 %v1292, %v1296
    %v1301 = vadd.f32 %v1297, 0.8
    %v1302 = vadd.f32 %v1298, 0.8
    %v1303 = vadd.f32 %v1299, 0.8
    %v1304 = vadd.f32 %v1300, 0.8
    %v1305 = vrsqrt.pop %v1301
    %v1306 = vrsqrt.pop %v1302
    %v1307 = vrsqrt.pop %v1303
    %v1308 = vrsqrt.pop %v1304
    %v1310 = vlaneseq
    %v1311 = vshrl.u32 %v1310, 7
    %v1312 = vsub.s32 0, %v1311
    %v1313 = vrot.slane %v1206, %v1312
    %v1314 = vlaneseq
    %v1315 = vshrl.u32 %v1314, 7
    %v1316 = vsub.s32 1, %v1315
    %v1317 = vrot.slane %v1206, %v1316
    %v1318 = vlaneseq
    %v1319 = vshrl.u32 %v1318, 7
    %v1320 = vsub.s32 2, %v1319
    %v1321 = vrot.slane %v1206, %v1320
    %v1322 = vlaneseq
    %v1323 = vshrl.u32 %v1322, 7
    %v1324 = vsub.s32 3, %v1323
    %v1325 = vrot.slane %v1206, %v1324
    %v1330 = vmul.f32 %v1305, %v1313
    %v1331 = vmul.f32 %v1306, %v1317
    %v1332 = vmul.f32 %v1307, %v1321
    %v1333 = vmul.f32 %v1308, %v1325
    %v1334 = vmul.f32 %v1285, %v1330
    %v1335 = vmul.f32 %v1286, %v1331
    %v1336 = vmul.f32 %v1287, %v1332
    %v1337 = vmul.f32 %v1288, %v1333
    %v1342 = vcombine.low %v1334, %v1335
    %v1343 = vcombine.low %v1336, %v1337
    %v1345 = vunpack.c.l.s4 1966171168
    %v1346 = vunpack.c.0.s8 %v1345
    %v1347 = vlaneseq
    %v1348 = vshrl.u32 %v1347, 7
    %v1349 = vsub.s32 %v1346, %v1348
    %v1350 = vrot.slane %v1342, %v1349
    %v1352 = vunpack.c.l.s4 1966171168
    %v1353 = vunpack.c.0.s8 %v1352
    %v1354 = vlaneseq
    %v1355 = vshrl.u32 %v1354, 7
    %v1356 = vsub.s32 %v1353, %v1355
    %v1357 = vrot.slane %v1343, %v1356
    %v1358 = vcombine.low %v1350, %v1357
    %v1360 = vunpack.c.l.s4 1966171168
    %v1361 = vunpack.c.0.s8 %v1360
    %v1362 = vlaneseq
    %v1363 = vshrl.u32 %v1362, 7
    %v1364 = vsub.s32 %v1361, %v1363
    %v1365 = vrot.slane %v1358, %v1364
    %v1367 = vsub.f32 %v1208, %v1365
    %v1368 = vlaneseq
    %v1369 = vshrl.u32 %v1368, 7
    %v1370 = vsub.s32 0, %v1369
    %v1371 = vrot.slane %v1330, %v1370
    %v1372 = vlaneseq
    %v1373 = vshrl.u32 %v1372, 7
    %v1374 = vsub.s32 0, %v1373
    %v1375 = vrot.slane %v1331, %v1374
    %v1376 = vlaneseq
    %v1377 = vshrl.u32 %v1376, 7
    %v1378 = vsub.s32 0, %v1377
    %v1379 = vrot.slane %v1332, %v1378
    %v1380 = vlaneseq
    %v1381 = vshrl.u32 %v1380, 7
    %v1382 = vsub.s32 0, %v1381
    %v1383 = vrot.slane %v1333, %v1382
    %v1384 = vmul.f32 %v1138, %v1371
    %v1385 = vmul.f32 %v1140, %v1375
    %v1386 = vmul.f32 %v1189, %v1379
    %v1387 = vmul.f32 %v1191, %v1383
    %v1388 = vmul.f32 %v1142, %v1371
    %v1389 = vmul.f32 %v1144, %v1375
    %v1390 = vmul.f32 %v1193, %v1379
    %v1391 = vmul.f32 %v1195, %v1383
    %v1392 = vmul.f32 %v1148, %v1371
    %v1393 = vmul.f32 %v1150, %v1375
    %v1394 = vmul.f32 %v1199, %v1379
    %v1395 = vmul.f32 %v1201, %v1383
    %v1397 = vlaneseq
    %v1398 = vshrl.u32 %v1397, 7
    %v1399 = vsub.s32 0, %v1398
    %v1400 = vrot.slane %v1367, %v1399
    %v1401 = vlaneseq
    %v1402 = vshrl.u32 %v1401, 7
    %v1403 = vsub.s32 1, %v1402
    %v1404 = vrot.slane %v1367, %v1403
    %v1405 = vlaneseq
    %v1406 = vshrl.u32 %v1405, 7
    %v1407 = vsub.s32 2, %v1406
    %v1408 = vrot.slane %v1367, %v1407
    %v1409 = vlaneseq
    %v1410 = vshrl.u32 %v1409, 7
    %v1411 = vsub.s32 3, %v1410
    %v1412 = vrot.slane %v1367, %v1411
    %v1417 = vadd.f32 %v1384, %v1400
    %v1418 = vadd.f32 %v1385, %v1404
    %v1419 = vadd.f32 %v1386, %v1408
    %v1420 = vadd.f32 %v1387, %v1412
    %v1421 = vadd.f32 %v1388, %v1400
    %v1422 = vadd.f32 %v1389, %v1404
    %v1423 = vadd.f32 %v1390, %v1408
    %v1424 = vadd.f32 %v1391, %v1412
    %v1425 = vadd.f32 %v1392, %v1400
    %v1426 = vadd.f32 %v1393, %v1404
    %v1427 = vadd.f32 %v1394, %v1408
    %v1428 = vadd.f32 %v1395, %v1412
    %v1429 = vmax.f32 %v1417, 0.0
    %v1430 = vmax.f32 %v1418, 0.0
    %v1431 = vmax.f32 %v1419, 0.0
    %v1432 = vmax.f32 %v1420, 0.0
    %v1433 = vmax.f32 %v1421, 0.0
    %v1434 = vmax.f32 %v1422, 0.0
    %v1435 = vmax.f32 %v1423, 0.0
    %v1436 = vmax.f32 %v1424, 0.0
    %v1437 = vmax.f32 %v1425, 0.0
    %v1438 = vmax.f32 %v1426, 0.0
    %v1439 = vmax.f32 %v1427, 0.0
    %v1440 = vmax.f32 %v1428, 0.0
    %v1441 = vld [vmem:[#allocation6] sm:$0xff]
    %v1442 = vld [vmem:[#allocation6 + $0x8] sm:$0xff]
    %v1443 = vld [vmem:[#allocation6 + $0x10] sm:$0xff]
    %v1444 = vld [vmem:[#allocation6 + $0x18] sm:$0xff]
    %v1445 = vld [vmem:[#allocation6 + $0x20] sm:$0xff]
    %v1446 = vld [vmem:[#allocation6 + $0x28] sm:$0xff]
    %v1447 = vld [vmem:[#allocation6 + $0x30] sm:$0xff]
    %v1448 = vld [vmem:[#allocation6 + $0x38] sm:$0xff]
    %v1449 = vld [vmem:[#allocation6 + $0x40] sm:$0xff]
    %v1450 = vld [vmem:[#allocation6 + $0x48] sm:$0xff]
    %v1451 = vld [vmem:[#allocation6 + $0x50] sm:$0xff]
    %v1452 = vld [vmem:[#allocation6 + $0x58] sm:$0xff]
    %v1453 = vld [vmem:[#allocation6 + $0x60] sm:$0xff]
    %v1454 = vld [vmem:[#allocation6 + $0x68] sm:$0xff]
    %v1455 = vld [vmem:[#allocation6 + $0x70] sm:$0xff]
    %v1456 = vld [vmem:[#allocation6 + $0x78] sm:$0xff]
    %v1457 = vld [vmem:[#allocation6 + $0x80] sm:$0xff]
    %v1458 = vld [vmem:[#allocation6 + $0x88] sm:$0xff]
    %v1459 = vld [vmem:[#allocation6 + $0x90] sm:$0xff]
    %v1460 = vld [vmem:[#allocation6 + $0x98] sm:$0xff]
    %v1461 = vld [vmem:[#allocation6 + $0xa0] sm:$0xff]
    %v1462 = vld [vmem:[#allocation6 + $0xa8] sm:$0xff]
    %v1463 = vld [vmem:[#allocation6 + $0xb0] sm:$0xff]
    %v1464 = vld [vmem:[#allocation6 + $0xb8] sm:$0xff]
    %v1465 = vld [vmem:[#allocation6 + $0xc0] sm:$0xff]
    %v1466 = vld [vmem:[#allocation6 + $0xc8] sm:$0xff]
    %v1467 = vld [vmem:[#allocation6 + $0xd0] sm:$0xff]
    %v1468 = vld [vmem:[#allocation6 + $0xd8] sm:$0xff]
    %v1469 = vld [vmem:[#allocation6 + $0xe0] sm:$0xff]
    %v1470 = vld [vmem:[#allocation6 + $0xe8] sm:$0xff]
    %v1471 = vld [vmem:[#allocation6 + $0xf0] sm:$0xff]
    %v1472 = vld [vmem:[#allocation6 + $0xf8] sm:$0xff]
    %v1473 = vld [vmem:[#allocation6 + $0x100] sm:$0xff]
    %v1474 = vld [vmem:[#allocation6 + $0x108] sm:$0xff]
    %v1475 = vld [vmem:[#allocation6 + $0x110] sm:$0xff]
    %v1476 = vld [vmem:[#allocation6 + $0x118] sm:$0xff]
    %v1477 = vld [vmem:[#allocation6 + $0x120] sm:$0xff]
    %v1478 = vld [vmem:[#allocation6 + $0x128] sm:$0xff]
    %v1479 = vld [vmem:[#allocation6 + $0x130] sm:$0xff]
    %v1480 = vld [vmem:[#allocation6 + $0x138] sm:$0xff]
    %v1481 = vld [vmem:[#allocation6 + $0x140] sm:$0xff]
    %v1482 = vld [vmem:[#allocation6 + $0x148] sm:$0xff]
    %v1483 = vld [vmem:[#allocation6 + $0x150] sm:$0xff]
    %v1484 = vld [vmem:[#allocation6 + $0x158] sm:$0xff]
    %v1485 = vld [vmem:[#allocation6 + $0x160] sm:$0xff]
    %v1486 = vld [vmem:[#allocation6 + $0x168] sm:$0xff]
    %v1487 = vld [vmem:[#allocation6 + $0x170] sm:$0xff]
    %v1488 = vld [vmem:[#allocation6 + $0x178] sm:$0xff]
    %v1489 = vld [vmem:[#allocation6 + $0x180] sm:$0xff]
    %v1490 = vld [vmem:[#allocation6 + $0x188] sm:$0xff]
    %v1491 = vld [vmem:[#allocation6 + $0x190] sm:$0xff]
    %v1492 = vld [vmem:[#allocation6 + $0x198] sm:$0xff]
    %v1493 = vld [vmem:[#allocation6 + $0x1a0] sm:$0xff]
    %v1494 = vld [vmem:[#allocation6 + $0x1a8] sm:$0xff]
    %v1495 = vld [vmem:[#allocation6 + $0x1b0] sm:$0xff]
    %v1496 = vld [vmem:[#allocation6 + $0x1b8] sm:$0xff]
    %v1497 = vld [vmem:[#allocation6 + $0x1c0] sm:$0xff]
    %v1498 = vld [vmem:[#allocation6 + $0x1c8] sm:$0xff]
    %v1499 = vld [vmem:[#allocation6 + $0x1d0] sm:$0xff]
    %v1500 = vld [vmem:[#allocation6 + $0x1d8] sm:$0xff]
    %v1501 = vld [vmem:[#allocation6 + $0x1e0] sm:$0xff]
    %v1502 = vld [vmem:[#allocation6 + $0x1e8] sm:$0xff]
    %v1503 = vld [vmem:[#allocation6 + $0x1f0] sm:$0xff]
    %v1504 = vld [vmem:[#allocation6 + $0x1f8] sm:$0xff]
    %v1505 = vpack.c.bf16 %v1433, %v1429
    %v1506 = vpack.c.bf16 %v1434, %v1430
    %v1507 = vpack.c.bf16 %v1435, %v1431
    %v1508 = vpack.c.bf16 %v1436, %v1432
    %v1509 = vpack.c.bf16 %v1437, %v1437
    %v1510 = vpack.c.bf16 %v1438, %v1438
    %v1511 = vpack.c.bf16 %v1439, %v1439
    %v1512 = vpack.c.bf16 %v1440, %v1440
    %v1577 = vunpack.c.l.b16 %v1441
    %v1578 = vunpack.c.h.b16 %v1441
    %v1579 = vunpack.c.l.b16 %v1442
    %v1580 = vunpack.c.h.b16 %v1442
    %v1581 = vunpack.c.l.b16 %v1443
    %v1582 = vunpack.c.h.b16 %v1443
    %v1583 = vunpack.c.l.b16 %v1444
    %v1584 = vunpack.c.h.b16 %v1444
    %v1585 = vunpack.c.l.b16 %v1445
    %v1586 = vunpack.c.h.b16 %v1445
    %v1587 = vunpack.c.l.b16 %v1446
    %v1588 = vunpack.c.h.b16 %v1446
    %v1589 = vunpack.c.l.b16 %v1447
    %v1590 = vunpack.c.h.b16 %v1447
    %v1591 = vunpack.c.l.b16 %v1448
    %v1592 = vunpack.c.h.b16 %v1448
    %v1593 = vunpack.c.l.b16 %v1449
    %v1594 = vunpack.c.h.b16 %v1449
    %v1595 = vunpack.c.l.b16 %v1450
    %v1596 = vunpack.c.h.b16 %v1450
    %v1597 = vunpack.c.l.b16 %v1451
    %v1598 = vunpack.c.h.b16 %v1451
    %v1599 = vunpack.c.l.b16 %v1452
    %v1600 = vunpack.c.h.b16 %v1452
    %v1601 = vunpack.c.l.b16 %v1453
    %v1602 = vunpack.c.h.b16 %v1453
    %v1603 = vunpack.c.l.b16 %v1454
    %v1604 = vunpack.c.h.b16 %v1454
    %v1605 = vunpack.c.l.b16 %v1455
    %v1606 = vunpack.c.h.b16 %v1455
    %v1607 = vunpack.c.l.b16 %v1456
    %v1608 = vunpack.c.h.b16 %v1456
    %v1609 = vunpack.c.l.b16 %v1457
    %v1610 = vunpack.c.h.b16 %v1457
    %v1611 = vunpack.c.l.b16 %v1458
    %v1612 = vunpack.c.h.b16 %v1458
    %v1613 = vunpack.c.l.b16 %v1459
    %v1614 = vunpack.c.h.b16 %v1459
    %v1615 = vunpack.c.l.b16 %v1460
    %v1616 = vunpack.c.h.b16 %v1460
    %v1617 = vunpack.c.l.b16 %v1461
    %v1618 = vunpack.c.h.b16 %v1461
    %v1619 = vunpack.c.l.b16 %v1462
    %v1620 = vunpack.c.h.b16 %v1462
    %v1621 = vunpack.c.l.b16 %v1463
    %v1622 = vunpack.c.h.b16 %v1463
    %v1623 = vunpack.c.l.b16 %v1464
    %v1624 = vunpack.c.h.b16 %v1464
    %v1625 = vunpack.c.l.b16 %v1465
    %v1626 = vunpack.c.h.b16 %v1465
    %v1627 = vunpack.c.l.b16 %v1466
    %v1628 = vunpack.c.h.b16 %v1466
    %v1629 = vunpack.c.l.b16 %v1467
    %v1630 = vunpack.c.h.b16 %v1467
    %v1631 = vunpack.c.l.b16 %v1468
    %v1632 = vunpack.c.h.b16 %v1468
    %v1633 = vunpack.c.l.b16 %v1469
    %v1634 = vunpack.c.h.b16 %v1469
    %v1635 = vunpack.c.l.b16 %v1470
    %v1636 = vunpack.c.h.b16 %v1470
    %v1637 = vunpack.c.l.b16 %v1471
    %v1638 = vunpack.c.h.b16 %v1471
    %v1639 = vunpack.c.l.b16 %v1472
    %v1640 = vunpack.c.h.b16 %v1472
    %v1641 = vunpack.c.l.b16 %v1473
    %v1642 = vunpack.c.h.b16 %v1473
    %v1643 = vunpack.c.l.b16 %v1474
    %v1644 = vunpack.c.h.b16 %v1474
    %v1645 = vunpack.c.l.b16 %v1475
    %v1646 = vunpack.c.h.b16 %v1475
    %v1647 = vunpack.c.l.b16 %v1476
    %v1648 = vunpack.c.h.b16 %v1476
    %v1649 = vunpack.c.l.b16 %v1477
    %v1650 = vunpack.c.h.b16 %v1477
    %v1651 = vunpack.c.l.b16 %v1478
    %v1652 = vunpack.c.h.b16 %v1478
    %v1653 = vunpack.c.l.b16 %v1479
    %v1654 = vunpack.c.h.b16 %v1479
    %v1655 = vunpack.c.l.b16 %v1480
    %v1656 = vunpack.c.h.b16 %v1480
    %v1657 = vunpack.c.l.b16 %v1481
    %v1658 = vunpack.c.h.b16 %v1481
    %v1659 = vunpack.c.l.b16 %v1482
    %v1660 = vunpack.c.h.b16 %v1482
    %v1661 = vunpack.c.l.b16 %v1483
    %v1662 = vunpack.c.h.b16 %v1483
    %v1663 = vunpack.c.l.b16 %v1484
    %v1664 = vunpack.c.h.b16 %v1484
    %v1665 = vunpack.c.l.b16 %v1485
    %v1666 = vunpack.c.h.b16 %v1485
    %v1667 = vunpack.c.l.b16 %v1486
    %v1668 = vunpack.c.h.b16 %v1486
    %v1669 = vunpack.c.l.b16 %v1487
    %v1670 = vunpack.c.h.b16 %v1487
    %v1671 = vunpack.c.l.b16 %v1488
    %v1672 = vunpack.c.h.b16 %v1488
    %v1673 = vunpack.c.l.b16 %v1489
    %v1674 = vunpack.c.h.b16 %v1489
    %v1675 = vunpack.c.l.b16 %v1490
    %v1676 = vunpack.c.h.b16 %v1490
    %v1677 = vunpack.c.l.b16 %v1491
    %v1678 = vunpack.c.h.b16 %v1491
    %v1679 = vunpack.c.l.b16 %v1492
    %v1680 = vunpack.c.h.b16 %v1492
    %v1681 = vunpack.c.l.b16 %v1493
    %v1682 = vunpack.c.h.b16 %v1493
    %v1683 = vunpack.c.l.b16 %v1494
    %v1684 = vunpack.c.h.b16 %v1494
    %v1685 = vunpack.c.l.b16 %v1495
    %v1686 = vunpack.c.h.b16 %v1495
    %v1687 = vunpack.c.l.b16 %v1496
    %v1688 = vunpack.c.h.b16 %v1496
    %v1689 = vunpack.c.l.b16 %v1497
    %v1690 = vunpack.c.h.b16 %v1497
    %v1691 = vunpack.c.l.b16 %v1498
    %v1692 = vunpack.c.h.b16 %v1498
    %v1693 = vunpack.c.l.b16 %v1499
    %v1694 = vunpack.c.h.b16 %v1499
    %v1695 = vunpack.c.l.b16 %v1500
    %v1696 = vunpack.c.h.b16 %v1500
    %v1697 = vunpack.c.l.b16 %v1501
    %v1698 = vunpack.c.h.b16 %v1501
    %v1699 = vunpack.c.l.b16 %v1502
    %v1700 = vunpack.c.h.b16 %v1502
    %v1701 = vunpack.c.l.b16 %v1503
    %v1702 = vunpack.c.h.b16 %v1503
    %v1703 = vunpack.c.l.b16 %v1504
    %v1704 = vunpack.c.h.b16 %v1504
    %v1705 = vpack.c.b16 %v1579, %v1577
    %v1706 = vpack.c.b16 %v1580, %v1578
    %v1707 = vpack.c.b16 %v1583, %v1581
    %v1708 = vpack.c.b16 %v1584, %v1582
    %v1709 = vpack.c.b16 %v1587, %v1585
    %v1710 = vpack.c.b16 %v1588, %v1586
    %v1711 = vpack.c.b16 %v1591, %v1589
    %v1712 = vpack.c.b16 %v1592, %v1590
    %v1713 = vpack.c.b16 %v1595, %v1593
    %v1714 = vpack.c.b16 %v1596, %v1594
    %v1715 = vpack.c.b16 %v1599, %v1597
    %v1716 = vpack.c.b16 %v1600, %v1598
    %v1717 = vpack.c.b16 %v1603, %v1601
    %v1718 = vpack.c.b16 %v1604, %v1602
    %v1719 = vpack.c.b16 %v1607, %v1605
    %v1720 = vpack.c.b16 %v1608, %v1606
    %v1721 = vpack.c.b16 %v1611, %v1609
    %v1722 = vpack.c.b16 %v1612, %v1610
    %v1723 = vpack.c.b16 %v1615, %v1613
    %v1724 = vpack.c.b16 %v1616, %v1614
    %v1725 = vpack.c.b16 %v1619, %v1617
    %v1726 = vpack.c.b16 %v1620, %v1618
    %v1727 = vpack.c.b16 %v1623, %v1621
    %v1728 = vpack.c.b16 %v1624, %v1622
    %v1729 = vpack.c.b16 %v1627, %v1625
    %v1730 = vpack.c.b16 %v1628, %v1626
    %v1731 = vpack.c.b16 %v1631, %v1629
    %v1732 = vpack.c.b16 %v1632, %v1630
    %v1733 = vpack.c.b16 %v1635, %v1633
    %v1734 = vpack.c.b16 %v1636, %v1634
    %v1735 = vpack.c.b16 %v1639, %v1637
    %v1736 = vpack.c.b16 %v1640, %v1638
    %v1737 = vpack.c.b16 %v1643, %v1641
    %v1738 = vpack.c.b16 %v1644, %v1642
    %v1739 = vpack.c.b16 %v1647, %v1645
    %v1740 = vpack.c.b16 %v1648, %v1646
    %v1741 = vpack.c.b16 %v1651, %v1649
    %v1742 = vpack.c.b16 %v1652, %v1650
    %v1743 = vpack.c.b16 %v1655, %v1653
    %v1744 = vpack.c.b16 %v1656, %v1654
    %v1745 = vpack.c.b16 %v1659, %v1657
    %v1746 = vpack.c.b16 %v1660, %v1658
    %v1747 = vpack.c.b16 %v1663, %v1661
    %v1748 = vpack.c.b16 %v1664, %v1662
    %v1749 = vpack.c.b16 %v1667, %v1665
    %v1750 = vpack.c.b16 %v1668, %v1666
    %v1751 = vpack.c.b16 %v1671, %v1669
    %v1752 = vpack.c.b16 %v1672, %v1670
    %v1753 = vpack.c.b16 %v1675, %v1673
    %v1754 = vpack.c.b16 %v1676, %v1674
    %v1755 = vpack.c.b16 %v1679, %v1677
    %v1756 = vpack.c.b16 %v1680, %v1678
    %v1757 = vpack.c.b16 %v1683, %v1681
    %v1758 = vpack.c.b16 %v1684, %v1682
    %v1759 = vpack.c.b16 %v1687, %v1685
    %v1760 = vpack.c.b16 %v1688, %v1686
    %v1761 = vpack.c.b16 %v1691, %v1689
    %v1762 = vpack.c.b16 %v1692, %v1690
    %v1763 = vpack.c.b16 %v1695, %v1693
    %v1764 = vpack.c.b16 %v1696, %v1694
    %v1765 = vpack.c.b16 %v1699, %v1697
    %v1766 = vpack.c.b16 %v1700, %v1698
    %v1767 = vpack.c.b16 %v1703, %v1701
    %v1768 = vpack.c.b16 %v1704, %v1702
    %1833 = vmatprep.subr.bf16.mxu0 %v1706
    %1834 = vmatpush1.bf16.msra.mxu0 %v1705
    %1835 = vmatprep.subr.bf16.mxu0 %v1708
    %1836 = vmatpush1.bf16.msra.mxu0 %v1707
    %1837 = vmatprep.subr.bf16.mxu0 %v1710
    %1838 = vmatpush1.bf16.msra.mxu0 %v1709
    %1839 = vmatprep.subr.bf16.mxu0 %v1712
    %1840 = vmatpush1.bf16.msra.mxu0 %v1711
    %1841 = vmatprep.subr.bf16.mxu0 %v1714
    %1842 = vmatpush1.bf16.msra.mxu0 %v1713
    %1843 = vmatprep.subr.bf16.mxu0 %v1716
    %1844 = vmatpush1.bf16.msra.mxu0 %v1715
    %1845 = vmatprep.subr.bf16.mxu0 %v1718
    %1846 = vmatpush1.bf16.msra.mxu0 %v1717
    %1847 = vmatprep.subr.bf16.mxu0 %v1720
    %1848 = vmatpush1.bf16.msra.mxu0 %v1719
    %1849 = vmatprep.subr.bf16.mxu0 %v1722
    %1850 = vmatpush1.bf16.msra.mxu0 %v1721
    %1851 = vmatprep.subr.bf16.mxu0 %v1724
    %1852 = vmatpush1.bf16.msra.mxu0 %v1723
    %1853 = vmatprep.subr.bf16.mxu0 %v1726
    %1854 = vmatpush1.bf16.msra.mxu0 %v1725
    %1855 = vmatprep.subr.bf16.mxu0 %v1728
    %1856 = vmatpush1.bf16.msra.mxu0 %v1727
    %1857 = vmatprep.subr.bf16.mxu0 %v1730
    %1858 = vmatpush1.bf16.msra.mxu0 %v1729
    %1859 = vmatprep.subr.bf16.mxu0 %v1732
    %1860 = vmatpush1.bf16.msra.mxu0 %v1731
    %1861 = vmatprep.subr.bf16.mxu0 %v1734
    %1862 = vmatpush1.bf16.msra.mxu0 %v1733
    %1863 = vmatprep.subr.bf16.mxu0 %v1736
    %1864 = vmatpush1.bf16.msra.mxu0 %v1735
    %1865 = vmatprep.mubr.bf16.mxu0 %v1506
    %1866 = vmatmul.mubr.bf16.gmra.mrb[0].mxu0 %v1505
    %v1867 = vpop.f32.mrb[0].mxu0
    %v1868 = vadd.f32 0.0, %v1867
    %v1869 = vpop.f32.mrb[0].mxu0
    %v1870 = vadd.f32 0.0, %v1869
    %v1871 = vpop.f32.mrb[0].mxu0
    %v1872 = vadd.f32 0.0, %v1871
    %v1873 = vpop.f32.mrb[0].mxu0
    %v1874 = vadd.f32 0.0, %v1873
    %1875 = vmatprep.mubr.bf16.mxu0 %v1510
    %1876 = vmatmul.mubr.bf16.gmra.mrb[0].mxu0 %v1509
    %v1877 = vpop.f32.mrb[0].mxu0
    %v1878 = vadd.f32 0.0, %v1877
    %v1879 = vpop.f32.mrb[0].mxu0
    %v1880 = vadd.f32 0.0, %v1879
    %v1881 = vpop.f32.mrb[0].mxu0
    %v1882 = vpop.f32.mrb[0].mxu0
    %1883 = vdwg.mxu0
    %1884 = vmatprep.subr.bf16.mxu0 %v1738
    %1885 = vmatpush1.bf16.msra.mxu0 %v1737
    %1886 = vmatprep.subr.bf16.mxu0 %v1740
    %1887 = vmatpush1.bf16.msra.mxu0 %v1739
    %1888 = vmatprep.subr.bf16.mxu0 %v1742
    %1889 = vmatpush1.bf16.msra.mxu0 %v1741
    %1890 = vmatprep.subr.bf16.mxu0 %v1744
    %1891 = vmatpush1.bf16.msra.mxu0 %v1743
    %1892 = vmatprep.subr.bf16.mxu0 %v1746
    %1893 = vmatpush1.bf16.msra.mxu0 %v1745
    %1894 = vmatprep.subr.bf16.mxu0 %v1748
    %1895 = vmatpush1.bf16.msra.mxu0 %v1747
    %1896 = vmatprep.subr.bf16.mxu0 %v1750
    %1897 = vmatpush1.bf16.msra.mxu0 %v1749
    %1898 = vmatprep.subr.bf16.mxu0 %v1752
    %1899 = vmatpush1.bf16.msra.mxu0 %v1751
    %1900 = vmatprep.subr.bf16.mxu0 %v1754
    %1901 = vmatpush1.bf16.msra.mxu0 %v1753
    %1902 = vmatprep.subr.bf16.mxu0 %v1756
    %1903 = vmatpush1.bf16.msra.mxu0 %v1755
    %1904 = vmatprep.subr.bf16.mxu0 %v1758
    %1905 = vmatpush1.bf16.msra.mxu0 %v1757
    %1906 = vmatprep.subr.bf16.mxu0 %v1760
    %1907 = vmatpush1.bf16.msra.mxu0 %v1759
    %1908 = vmatprep.subr.bf16.mxu0 %v1762
    %1909 = vmatpush1.bf16.msra.mxu0 %v1761
    %1910 = vmatprep.subr.bf16.mxu0 %v1764
    %1911 = vmatpush1.bf16.msra.mxu0 %v1763
    %1912 = vmatprep.subr.bf16.mxu0 %v1766
    %1913 = vmatpush1.bf16.msra.mxu0 %v1765
    %1914 = vmatprep.subr.bf16.mxu0 %v1768
    %1915 = vmatpush1.bf16.msra.mxu0 %v1767
    %1916 = vmatprep.mubr.bf16.mxu0 %v1508
    %1917 = vmatmul.mubr.bf16.gmra.mrb[0].mxu0 %v1507
    %v1918 = vpop.f32.mrb[0].mxu0
    %v1919 = vadd.f32 %v1868, %v1918
    %v1920 = vpop.f32.mrb[0].mxu0
    %v1921 = vadd.f32 %v1870, %v1920
    %v1922 = vpop.f32.mrb[0].mxu0
    %v1923 = vadd.f32 %v1872, %v1922
    %v1924 = vpop.f32.mrb[0].mxu0
    %v1925 = vadd.f32 %v1874, %v1924
    %1926 = vmatprep.mubr.bf16.mxu0 %v1512
    %1927 = vmatmul.mubr.bf16.gmra.mrb[0].mxu0 %v1511
    %v1928 = vpop.f32.mrb[0].mxu0
    %v1929 = vadd.f32 %v1878, %v1928
    %v1930 = vpop.f32.mrb[0].mxu0
    %v1931 = vadd.f32 %v1880, %v1930
    %v1932 = vpop.f32.mrb[0].mxu0
    %v1933 = vpop.f32.mrb[0].mxu0
    %1934 = vdwg.mxu0
    %s1935 = scalar_lea.vmem %s6, 4
    %v1936 = vld [vmem:[%s1935] ss:$8 sm:$0x3]
    %s1937 = scalar_lea.vmem %s6, 5
    %v1938 = vld [vmem:[%s1937] ss:$8 sm:$0x3]
    %v1939 = vadd.f32 %v1919, %v1923
    %v1940 = vadd.f32 %v1939, %v1929
    %v1941 = vrot.slane %v1940, 4
    %v1942 = vadd.f32 %v1940, %v1941
    %v1943 = vrot.slane %v1942, 2
    %v1944 = vadd.f32 %v1942, %v1943
    %v1945 = vrot.slane %v1944, 1
    %v1946 = vadd.f32 %v1944, %v1945
    %v1947 = vadd.f32 %v1921, %v1925
    %v1948 = vadd.f32 %v1947, %v1931
    %v1949 = vrot.slane %v1948, 4
    %v1950 = vadd.f32 %v1948, %v1949
    %v1951 = vrot.slane %v1950, 2
    %v1952 = vadd.f32 %v1950, %v1951
    %v1953 = vrot.slane %v1952, 1
    %v1954 = vadd.f32 %v1952, %v1953
    %v1955 = vmul.f32 %v1919, %v1919
    %v1956 = vmul.f32 %v1921, %v1921
    %v1957 = vmul.f32 %v1923, %v1923
    %v1958 = vmul.f32 %v1925, %v1925
    %v1959 = vmul.f32 %v1929, %v1929
    %v1960 = vmul.f32 %v1931, %v1931
    %v1961 = vadd.f32 %v1955, %v1957
    %v1962 = vadd.f32 %v1961, %v1959
    %v1963 = vrot.slane %v1962, 4
    %v1964 = vadd.f32 %v1962, %v1963
    %v1965 = vrot.slane %v1964, 2
    %v1966 = vadd.f32 %v1964, %v1965
    %v1967 = vrot.slane %v1966, 1
    %v1968 = vadd.f32 %v1966, %v1967
    %v1969 = vadd.f32 %v1956, %v1958
    %v1970 = vadd.f32 %v1969, %v1960
    %v1971 = vrot.slane %v1970, 4
    %v1972 = vadd.f32 %v1970, %v1971
    %v1973 = vrot.slane %v1972, 2
    %v1974 = vadd.f32 %v1972, %v1973
    %v1975 = vrot.slane %v1974, 1
    %v1976 = vadd.f32 %v1974, %v1975
    %v1977 = vmul.f32 %v1946, 0.041666668
    %v1978 = vmul.f32 %v1954, 0.041666668
    %v1979 = vmul.f32 %v1968, 0.041666668
    %v1980 = vmul.f32 %v1976, 0.041666668
    %v1981 = vmul.f32 %v1977, %v1977
    %v1982 = vmul.f32 %v1978, %v1978
    %v1983 = vsub.f32 %v1979, %v1981
    %v1984 = vsub.f32 %v1980, %v1982
    %v1985 = vadd.f32 %v1983, 0.8
    %v1986 = vadd.f32 %v1984, 0.8
    %v1987 = vrsqrt.pop %v1985
    %v1988 = vrsqrt.pop %v1986
    %v1990 = vlaneseq
    %v1991 = vshrl.u32 %v1990, 7
    %v1992 = vsub.s32 0, %v1991
    %v1993 = vrot.slane %v1936, %v1992
    %v1994 = vlaneseq
    %v1995 = vshrl.u32 %v1994, 7
    %v1996 = vsub.s32 1, %v1995
    %v1997 = vrot.slane %v1936, %v1996
    %v2000 = vmul.f32 %v1987, %v1993
    %v2001 = vmul.f32 %v1988, %v1997
    %v2002 = vmul.f32 %v1977, %v2000
    %v2003 = vmul.f32 %v1978, %v2001
    %v2006 = vcombine.low %v2002, %v2003
    %v2008 = vunpack.c.l.s4 1966171168
    %v2009 = vunpack.c.0.s8 %v2008
    %v2010 = vlaneseq
    %v2011 = vshrl.u32 %v2010, 7
    %v2012 = vsub.s32 %v2009, %v2011
    %v2013 = vrot.slane %v2006, %v2012
    %v2015 = vunpack.c.l.s4 1966171168
    %v2016 = vunpack.c.0.s8 %v2015
    %v2017 = vlaneseq
    %v2018 = vshrl.u32 %v2017, 7
    %v2019 = vsub.s32 %v2016, %v2018
    %v2020 = vrot.slane %v2013, %v2019
    %v2022 = vsub.f32 %v1938, %v2020
    %v2023 = vlaneseq
    %v2024 = vshrl.u32 %v2023, 7
    %v2025 = vsub.s32 0, %v2024
    %v2026 = vrot.slane %v2000, %v2025
    %v2027 = vlaneseq
    %v2028 = vshrl.u32 %v2027, 7
    %v2029 = vsub.s32 0, %v2028
    %v2030 = vrot.slane %v2001, %v2029
    %v2031 = vmul.f32 %v1919, %v2026
    %v2032 = vmul.f32 %v1921, %v2030
    %v2033 = vmul.f32 %v1923, %v2026
    %v2034 = vmul.f32 %v1925, %v2030
    %v2035 = vmul.f32 %v1929, %v2026
    %v2036 = vmul.f32 %v1931, %v2030
    %v2038 = vlaneseq
    %v2039 = vshrl.u32 %v2038, 7
    %v2040 = vsub.s32 0, %v2039
    %v2041 = vrot.slane %v2022, %v2040
    %v2042 = vlaneseq
    %v2043 = vshrl.u32 %v2042, 7
    %v2044 = vsub.s32 1, %v2043
    %v2045 = vrot.slane %v2022, %v2044
    %v2048 = vadd.f32 %v2031, %v2041
    %v2049 = vadd.f32 %v2032, %v2045
    %v2050 = vadd.f32 %v2033, %v2041
    %v2051 = vadd.f32 %v2034, %v2045
    %v2052 = vadd.f32 %v2035, %v2041
    %v2053 = vadd.f32 %v2036, %v2045
    %v2054 = vmax.f32 %v2048, 0.0
    %v2055 = vmax.f32 %v2049, 0.0
    %v2056 = vmax.f32 %v2050, 0.0
    %v2057 = vmax.f32 %v2051, 0.0
    %v2058 = vmax.f32 %v2052, 0.0
    %v2059 = vmax.f32 %v2053, 0.0
    %v2060 = vld [vmem:[%s5] sm:$0xf]
    %v2061 = vld [vmem:[%s5 + $0x4] sm:$0xf]
    %v2062 = vld [vmem:[%s5 + $0x8] sm:$0xf]
    %v2063 = vld [vmem:[%s5 + $0xc] sm:$0xf]
    %v2064 = vld [vmem:[%s5 + $0x10] sm:$0xf]
    %v2065 = vld [vmem:[%s5 + $0x14] sm:$0xf]
    %v2066 = vld [vmem:[%s5 + $0x18] sm:$0xf]
    %v2067 = vld [vmem:[%s5 + $0x1c] sm:$0xf]
    %v2068 = vld [vmem:[%s5 + $0x20] sm:$0xf]
    %v2069 = vld [vmem:[%s5 + $0x24] sm:$0xf]
    %v2070 = vld [vmem:[%s5 + $0x28] sm:$0xf]
    %v2071 = vld [vmem:[%s5 + $0x2c] sm:$0xf]
    %v2072 = vld [vmem:[%s5 + $0x30] sm:$0xf]
    %v2073 = vld [vmem:[%s5 + $0x34] sm:$0xf]
    %v2074 = vld [vmem:[%s5 + $0x38] sm:$0xf]
    %v2075 = vld [vmem:[%s5 + $0x3c] sm:$0xf]
    %v2076 = vld [vmem:[%s5 + $0x40] sm:$0xf]
    %v2077 = vld [vmem:[%s5 + $0x44] sm:$0xf]
    %v2078 = vld [vmem:[%s5 + $0x48] sm:$0xf]
    %v2079 = vld [vmem:[%s5 + $0x4c] sm:$0xf]
    %v2080 = vld [vmem:[%s5 + $0x50] sm:$0xf]
    %v2081 = vld [vmem:[%s5 + $0x54] sm:$0xf]
    %v2082 = vld [vmem:[%s5 + $0x58] sm:$0xf]
    %v2083 = vld [vmem:[%s5 + $0x5c] sm:$0xf]
    %v2084 = vld [vmem:[%s5 + $0x60] sm:$0xf]
    %v2085 = vld [vmem:[%s5 + $0x64] sm:$0xf]
    %v2086 = vld [vmem:[%s5 + $0x68] sm:$0xf]
    %v2087 = vld [vmem:[%s5 + $0x6c] sm:$0xf]
    %v2088 = vld [vmem:[%s5 + $0x70] sm:$0xf]
    %v2089 = vld [vmem:[%s5 + $0x74] sm:$0xf]
    %v2090 = vld [vmem:[%s5 + $0x78] sm:$0xf]
    %v2091 = vld [vmem:[%s5 + $0x7c] sm:$0xf]
    %v2092 = vpack.c.bf16 %v2056, %v2054
    %v2093 = vpack.c.bf16 %v2057, %v2055
    %v2094 = vpack.c.bf16 %v2058, %v2058
    %v2095 = vpack.c.bf16 %v2059, %v2059
    %v2096 = vld [vmem:[%s6 + $0x6] ss:$0 sm:$0xff]
    %v2129 = vunpack.c.l.b16 %v2060
    %v2130 = vunpack.c.l.b16 %v2061
    %v2131 = vunpack.c.l.b16 %v2062
    %v2132 = vunpack.c.l.b16 %v2063
    %v2133 = vunpack.c.l.b16 %v2064
    %v2134 = vunpack.c.l.b16 %v2065
    %v2135 = vunpack.c.l.b16 %v2066
    %v2136 = vunpack.c.l.b16 %v2067
    %v2137 = vunpack.c.l.b16 %v2068
    %v2138 = vunpack.c.l.b16 %v2069
    %v2139 = vunpack.c.l.b16 %v2070
    %v2140 = vunpack.c.l.b16 %v2071
    %v2141 = vunpack.c.l.b16 %v2072
    %v2142 = vunpack.c.l.b16 %v2073
    %v2143 = vunpack.c.l.b16 %v2074
    %v2144 = vunpack.c.l.b16 %v2075
    %v2145 = vunpack.c.l.b16 %v2076
    %v2146 = vunpack.c.l.b16 %v2077
    %v2147 = vunpack.c.l.b16 %v2078
    %v2148 = vunpack.c.l.b16 %v2079
    %v2149 = vunpack.c.l.b16 %v2080
    %v2150 = vunpack.c.l.b16 %v2081
    %v2151 = vunpack.c.l.b16 %v2082
    %v2152 = vunpack.c.l.b16 %v2083
    %v2153 = vunpack.c.l.b16 %v2084
    %v2154 = vunpack.c.l.b16 %v2085
    %v2155 = vunpack.c.l.b16 %v2086
    %v2156 = vunpack.c.l.b16 %v2087
    %v2157 = vunpack.c.l.b16 %v2088
    %v2158 = vunpack.c.l.b16 %v2089
    %v2159 = vunpack.c.l.b16 %v2090
    %v2160 = vunpack.c.l.b16 %v2091
    %v2161 = vpack.c.b16 %v2130, %v2129
    %v2162 = vpack.c.b16 %v2132, %v2131
    %v2163 = vpack.c.b16 %v2134, %v2133
    %v2164 = vpack.c.b16 %v2136, %v2135
    %v2165 = vpack.c.b16 %v2138, %v2137
    %v2166 = vpack.c.b16 %v2140, %v2139
    %v2167 = vpack.c.b16 %v2142, %v2141
    %v2168 = vpack.c.b16 %v2144, %v2143
    %v2169 = vpack.c.b16 %v2146, %v2145
    %v2170 = vpack.c.b16 %v2148, %v2147
    %v2171 = vpack.c.b16 %v2150, %v2149
    %v2172 = vpack.c.b16 %v2152, %v2151
    %v2173 = vpack.c.b16 %v2154, %v2153
    %v2174 = vpack.c.b16 %v2156, %v2155
    %v2175 = vpack.c.b16 %v2158, %v2157
    %v2176 = vpack.c.b16 %v2160, %v2159
    %2193 = vmatprep.subr.bf16.mxu0 0
    %2194 = vmatpush1.bf16.msra.mxu0 %v2161
    %2195 = vmatprep.subr.bf16.mxu0 0
    %2196 = vmatpush1.bf16.msra.mxu0 %v2162
    %2197 = vmatprep.subr.bf16.mxu0 0
    %2198 = vmatpush1.bf16.msra.mxu0 %v2163
    %2199 = vmatprep.subr.bf16.mxu0 0
    %2200 = vmatpush1.bf16.msra.mxu0 %v2164
    %2201 = vmatprep.subr.bf16.mxu0 0
    %2202 = vmatpush1.bf16.msra.mxu0 %v2165
    %2203 = vmatprep.subr.bf16.mxu0 0
    %2204 = vmatpush1.bf16.msra.mxu0 %v2166
    %2205 = vmatprep.subr.bf16.mxu0 0
    %2206 = vmatpush1.bf16.msra.mxu0 %v2167
    %2207 = vmatprep.subr.bf16.mxu0 0
    %2208 = vmatpush1.bf16.msra.mxu0 %v2168
    %2209 = vmatprep.subr.bf16.mxu0 0
    %2210 = vmatpush1.bf16.msra.mxu0 %v2169
    %2211 = vmatprep.subr.bf16.mxu0 0
    %2212 = vmatpush1.bf16.msra.mxu0 %v2170
    %2213 = vmatprep.subr.bf16.mxu0 0
    %2214 = vmatpush1.bf16.msra.mxu0 %v2171
    %2215 = vmatprep.subr.bf16.mxu0 0
    %2216 = vmatpush1.bf16.msra.mxu0 %v2172
    %2217 = vmatprep.subr.bf16.mxu0 0
    %2218 = vmatpush1.bf16.msra.mxu0 %v2173
    %2219 = vmatprep.subr.bf16.mxu0 0
    %2220 = vmatpush1.bf16.msra.mxu0 %v2174
    %2221 = vmatprep.subr.bf16.mxu0 0
    %2222 = vmatpush1.bf16.msra.mxu0 %v2175
    %2223 = vmatprep.subr.bf16.mxu0 0
    %2224 = vmatpush1.bf16.msra.mxu0 %v2176
    %2225 = vmatprep.mubr.bf16.mxu0 %v2093
    %2226 = vmatmul.mubr.bf16.gmra.mrb[0].mxu0 %v2092
    %v2227 = vpop.f32.mrb[0].mxu0
    %v2228 = vadd.f32 %v2096, %v2227
    %v2229 = vpop.f32.mrb[0].mxu0
    %v2230 = vpop.f32.mrb[0].mxu0
    %v2231 = vadd.f32 %v2096, %v2230
    %v2232 = vpop.f32.mrb[0].mxu0
    %2233 = vmatprep.mubr.bf16.mxu0 %v2095
    %2234 = vmatmul.mubr.bf16.gmra.mrb[0].mxu0 %v2094
    %v2235 = vpop.f32.mrb[0].mxu0
    %v2236 = vadd.f32 %v2096, %v2235
    %v2237 = vpop.f32.mrb[0].mxu0
    %v2238 = vpop.f32.mrb[0].mxu0
    %v2239 = vpop.f32.mrb[0].mxu0
    %2240 = vdwg.mxu0
    %vm2241 = vcmask 7168
    %2242 = vst.msk [vmem:[%s7] sm:$0xff] %vm2241, %v2228
    %2243 = vst.msk [vmem:[%s7 + $0x8] sm:$0xff] %vm2241, %v2231
    %2244 = vst.msk [vmem:[%s7 + $0x10] sm:$0xff] %vm2241, %v2236
    // Predicated region
    $region42: #{tpu_custom_call.1} parent=1 // pred_check
      _
    $region43: #{tpu_custom_call.1} parent=1 // pred_check_branch
      %2246 = sbr.rel (0) target = $region45
    $region44: #{tpu_custom_call.1} parent=1 // pred_region
      _
    $region45: #{tpu_custom_call.1} parent=1 // pred_fallthru
      _
    // Predicated region
    $region46: #{tpu_custom_call.1} parent=1 // pred_check
      _
    $region47: #{tpu_custom_call.1} parent=1 // pred_check_branch
      %2248 = sbr.rel (0) target = $region49
    $region48: #{tpu_custom_call.1} parent=1 // pred_region
      _
    $region49: #{tpu_custom_call.1} parent=1 // pred_fallthru
      _
    %2249 = vsyncpa [#allocation3], 1
    %2250 = vsyncpa [#allocation5], 1

</llo_original>
